<compile_context>
chip_gen: v6e
topology: v6e:2x2x1
jax: 0.10.0
libtpu: 0.0.40
codegen_flags: <defaults>
</compile_context>

<pallas_src>
import jax
import jax.numpy as jnp
from jax.experimental import pallas as pl
from jax.experimental.pallas import tpu as pltpu


# ----------------------------------------------------------------------------
# Kernel
# ----------------------------------------------------------------------------
def _fusion_kernel(x_ref,
                   w1_ref, b1_ref,
                   w2_ref, b2_ref,
                   w3_ref, b3_ref,
                   w4_ref, b4_ref,
                   o_ref):
    """One (bblk, C_in, tn) tile of points through the full MLP stack.

    x_ref : (bblk, C_in, tn)   bf16 activations, points on lanes
    wK    : (C_out, C_in)      bf16, BN already folded in
    bK    : (C_out, 1)         f32, conv-bias + BN shift folded
    o_ref : (bblk, C_last, tn)
    """

    def conv(h_bf16, w_ref, b_ref, relu):
        # bf16 x bf16 -> f32 accumulate on the MXU; bias/ReLU in f32 on the VPU.
        y = jnp.dot(w_ref[...], h_bf16, preferred_element_type=jnp.float32)
        y = y + b_ref[...]
        if relu:
            y = jnp.maximum(y, 0.0)
        return y

    bblk = x_ref.shape[0]
    # Static unroll over the (small) per-step batch block: each iteration is a
    # clean 2-D matmul chain on the MXU.
    for bi in range(bblk):
        h = x_ref[bi].astype(jnp.bfloat16)               # (C_in, tn)
        h = conv(h, w1_ref, b1_ref, True).astype(jnp.bfloat16)
        h = conv(h, w2_ref, b2_ref, True).astype(jnp.bfloat16)
        h = conv(h, w3_ref, b3_ref, True).astype(jnp.bfloat16)
        y = conv(h, w4_ref, b4_ref, False)               # final plain Conv1d
        o_ref[bi] = y.astype(o_ref.dtype)


# ----------------------------------------------------------------------------
# Parameters
# ----------------------------------------------------------------------------
def init_params(key, in_channels=256, conv_ratio=(0.5, 0.5, 1.0)):
    """Deterministic synthetic parameters matching the module's __init__ shapes.

    Raw (unfolded) PyTorch-layout parameters:
      convK_w : (C_out, C_in)   1x1 Conv1d weight (kernel dim squeezed)
      convK_b : (C_out,)        Conv1d bias
      bnK_*   : (C_out,)        BN1d gamma/beta/running_mean/running_var
    """
    conv_channels = []
    prev = in_channels * 2
    for k in conv_ratio:
        prev = int(prev * k)
        conv_channels.append(prev)
    ins = [conv_channels[0], conv_channels[0], conv_channels[1]]
    outs = list(conv_channels)

    params = {}
    keys = jax.random.split(key, 4 * len(outs) + 2)
    ki = 0
    for li, (ci, co) in enumerate(zip(ins, outs), start=1):
        params[f"conv{li}_w"] = (jax.random.normal(keys[ki], (co, ci), jnp.float32)
                                 / jnp.sqrt(ci)); ki += 1
        params[f"conv{li}_b"] = 0.1 * jax.random.normal(keys[ki], (co,), jnp.float32); ki += 1
        params[f"bn{li}_gamma"] = 1.0 + 0.1 * jax.random.normal(keys[ki], (co,), jnp.float32); ki += 1
        params[f"bn{li}_beta"] = 0.1 * jax.random.normal(keys[ki], (co,), jnp.float32); ki += 1
        params[f"bn{li}_mean"] = 0.05 * jnp.arange(co, dtype=jnp.float32) / co
        params[f"bn{li}_var"] = 1.0 + 0.1 * jnp.cos(jnp.arange(co, dtype=jnp.float32)) ** 2
    c_last = outs[-1]
    params["conv4_w"] = (jax.random.normal(keys[ki], (c_last, c_last), jnp.float32)
                         / jnp.sqrt(c_last)); ki += 1
    params["conv4_b"] = 0.1 * jax.random.normal(keys[ki], (c_last,), jnp.float32)
    return params


def fold_params(params, eps=1e-5, matmul_dtype=jnp.bfloat16):
    """Fold BN1d(eval) and conv bias into each 1x1-conv weight (exact algebra).

    Conv: y = W x + b ; BN: s*y + t with s = gamma/sqrt(var+eps), t = beta - s*mean
      =>  y' = (s*W) x + (s*b + t)
    """
    folded = {}
    for li in (1, 2, 3):
        w = params[f"conv{li}_w"]
        b = params[f"conv{li}_b"]
        s = params[f"bn{li}_gamma"] / jnp.sqrt(params[f"bn{li}_var"] + eps)
        t = params[f"bn{li}_beta"] - params[f"bn{li}_mean"] * s
        folded[f"w{li}"] = (w * s[:, None]).astype(matmul_dtype)
        folded[f"b{li}"] = (s * b + t).reshape(-1, 1).astype(jnp.float32)
    folded["w4"] = params["conv4_w"].astype(matmul_dtype)
    folded["b4"] = params["conv4_b"].reshape(-1, 1).astype(jnp.float32)
    return folded


# ----------------------------------------------------------------------------
# Wrapper
# ----------------------------------------------------------------------------
def relation_feature_fusion(features, folded, *, tn=4096, out_dtype=jnp.bfloat16):
    """features: (B, C_in, N) NCW (PyTorch Conv1d layout). Returns (B, C_out, N).

    `out_dtype` defaults to bf16 (kernel is HBM-bound); pass jnp.float32 if the
    consumer needs full precision.
    """
    B, C_in, N = features.shape
    C_out = folded["w4"].shape[0]
    assert C_in == folded["w1"].shape[1], (C_in, folded["w1"].shape)

    # bf16 activations at the pallas_call boundary (ideally the producer
    # already emits bf16 so this cast is a no-op).
    if features.dtype != jnp.bfloat16:
        features = features.astype(jnp.bfloat16)

    # --- point-tile / grid selection -------------------------------------
    n_tiles = pl.cdiv(N, 128)                      # 128-point lane tiles
    tiles_per_step = max(1, min(tn // 128, n_tiles))
    grid_n = pl.cdiv(n_tiles, tiles_per_step)
    # v7x megacore: with B == 1 make sure there are >= 2 parallel grid steps.
    if B == 1 and grid_n == 1 and n_tiles >= 2:
        grid_n = 2
    # Rebalance so padding is at most (grid_n - 1) lane tiles.
    tiles_per_step = pl.cdiv(n_tiles, grid_n)
    tn_eff = tiles_per_step * 128
    N_pad = grid_n * tn_eff

    # Batch blocking: when each step would only carry a small point tile
    # (common here: N ~ a few hundred proposals), fold several batch items
    # into one grid step to amortize the ~0.35us/step pipeline overhead.
    bblk = 1
    if grid_n == 1 and B > 1 and tn_eff < 1024:
        want = min(B, max(1, 2048 // tn_eff))
        for d in range(want, 0, -1):
            if B % d == 0:
                bblk = d
                break
    grid = (B // bblk, grid_n)

    # Pad N (lane dim) so every block is full-size and stores stay lane-dense.
    if N_pad != N:
        features = jnp.pad(features, ((0, 0), (0, 0), (0, N_pad - N)))

    flat_inputs = [
        features,
        folded["w1"], folded["b1"],
        folded["w2"], folded["b2"],
        folded["w3"], folded["b3"],
        folded["w4"], folded["b4"],
    ]

    def _const_spec(arr):
        # Full-array, constant block index: DMA'd once, resident across the grid.
        return pl.BlockSpec(arr.shape, lambda b, j: (0, 0))

    in_specs = [pl.BlockSpec((bblk, C_in, tn_eff), lambda b, j: (b, 0, j))]
    in_specs += [_const_spec(a) for a in flat_inputs[1:]]
    out_specs = pl.BlockSpec((bblk, C_out, tn_eff), lambda b, j: (b, 0, j))

    out = pl.pallas_call(
        _fusion_kernel,
        out_shape=jax.ShapeDtypeStruct((B, C_out, N_pad), out_dtype),
        grid=grid,
        in_specs=in_specs,
        out_specs=out_specs,
        compiler_params=pltpu.CompilerParams(
            dimension_semantics=("parallel", "parallel"),
            vmem_limit_bytes=32 * 1024 * 1024,   # fits v7x (64 MiB physical) too
        ),
    )(*flat_inputs)

    if N_pad != N:
        out = out[..., :N]
    return out


# ----------------------------------------------------------------------------
# Pure-JAX reference (same folded bf16 params, same bf16-operand /
# f32-accumulate precision choice) for a numerical sanity check.
# ----------------------------------------------------------------------------
def _reference(features_bf16, folded, out_dtype=jnp.bfloat16):
    h = features_bf16  # (B, C, N), bf16
    for li, relu in ((1, True), (2, True), (3, True), (4, False)):
        w = folded[f"w{li}"]
        b = folded[f"b{li}"]
        y = jnp.einsum("oc,bcn->bon", w, h.astype(w.dtype),
                       preferred_element_type=jnp.float32)
        y = y + b[None]
        h = jnp.maximum(y, 0.0) if relu else y
        if li != 4:
            h = h.astype(jnp.bfloat16)
    return h.astype(out_dtype)


if __name__ == "__main__":
    key = jax.random.PRNGKey(0)
    k_feat, k_param = jax.random.split(key)

    raw_params = init_params(k_param, in_channels=256, conv_ratio=(0.5, 0.5, 1.0))
    folded = fold_params(raw_params)

    def check(B, N, tn):
        feats = jax.random.normal(jax.random.fold_in(k_feat, 131 * N + B),
                                  (B, 256, N), jnp.float32).astype(jnp.bfloat16)
        out = jax.block_until_ready(relation_feature_fusion(feats, folded, tn=tn))
        ref = jax.block_until_ready(_reference(feats, folded))
        assert out.shape == (B, 128, N), out.shape
        o32 = out.astype(jnp.float32)
        r32 = ref.astype(jnp.float32)
        assert jnp.allclose(o32, r32, rtol=5e-2, atol=5e-2), \
            float(jnp.max(jnp.abs(o32 - r32)))

    # Small shapes consistent with the module default (C_in = conv_channels[0] = 256).
    check(2, 512, 256)    # aligned N, bblk=1, grid (2, 2)
    check(2, 500, 4096)   # unaligned N -> padded to 512, batch-blocked grid (1, 1)
    check(1, 512, 4096)   # B=1 -> forced >= 2 grid steps (v7x megacore)

    print("KERNEL_OK")
</pallas_src>

<mosaic_0001>
module attributes {stable_mosaic.version = 11 : i64} {
  func.func @_fusion_kernel(%arg0: i32, %arg1: i32, %arg2: memref<1x256x256xbf16, #tpu.memory_space<vmem>>, %arg3: memref<256x256xbf16, #tpu.memory_space<vmem>>, %arg4: memref<256x1xf32, #tpu.memory_space<vmem>>, %arg5: memref<128x256xbf16, #tpu.memory_space<vmem>>, %arg6: memref<128x1xf32, #tpu.memory_space<vmem>>, %arg7: memref<128x128xbf16, #tpu.memory_space<vmem>>, %arg8: memref<128x1xf32, #tpu.memory_space<vmem>>, %arg9: memref<128x128xbf16, #tpu.memory_space<vmem>>, %arg10: memref<128x1xf32, #tpu.memory_space<vmem>>, %arg11: memref<1x128x256xbf16, #tpu.memory_space<vmem>>) attributes {dimension_semantics = [#tpu.dimension_semantics<parallel>, #tpu.dimension_semantics<parallel>], iteration_bounds = array<i64: 2, 2>, scalar_prefetch = 0 : i64, scratch_operands = 0 : i64, tpu.core_type = #tpu.core_type<tc>, window_params = [{transform_indices = @transform_0, window_bounds = array<i64: 1, 256, 256>}, {pipeline_mode = #tpu.pipeline_mode<synchronous>, transform_indices = @transform_1, window_bounds = array<i64: 256, 256>}, {pipeline_mode = #tpu.pipeline_mode<synchronous>, transform_indices = @transform_2, window_bounds = array<i64: 256, 1>}, {pipeline_mode = #tpu.pipeline_mode<synchronous>, transform_indices = @transform_3, window_bounds = array<i64: 128, 256>}, {pipeline_mode = #tpu.pipeline_mode<synchronous>, transform_indices = @transform_4, window_bounds = array<i64: 128, 1>}, {pipeline_mode = #tpu.pipeline_mode<synchronous>, transform_indices = @transform_5, window_bounds = array<i64: 128, 128>}, {pipeline_mode = #tpu.pipeline_mode<synchronous>, transform_indices = @transform_6, window_bounds = array<i64: 128, 1>}, {pipeline_mode = #tpu.pipeline_mode<synchronous>, transform_indices = @transform_7, window_bounds = array<i64: 128, 128>}, {pipeline_mode = #tpu.pipeline_mode<synchronous>, transform_indices = @transform_8, window_bounds = array<i64: 128, 1>}, {transform_indices = @transform_9, window_bounds = array<i64: 1, 128, 256>}]} {
    %c0 = arith.constant 0 : index
    %c0_0 = arith.constant 0 : index
    %c0_1 = arith.constant 0 : index
    %0 = vector.load %arg2[%c0, %c0_0, %c0_1] : memref<1x256x256xbf16, #tpu.memory_space<vmem>>, vector<1x256x256xbf16>
    %1 = vector.shape_cast %0 : vector<1x256x256xbf16> to vector<256x256xbf16>
    %c0_2 = arith.constant 0 : index
    %c0_3 = arith.constant 0 : index
    %2 = vector.load %arg3[%c0_2, %c0_3] : memref<256x256xbf16, #tpu.memory_space<vmem>>, vector<256x256xbf16>
    %cst = arith.constant dense<0.000000e+00> : vector<256x256xf32>
    %3 = tpu.matmul %2, %1, %cst {dimension_numbers = #tpu.dot_dimension_numbers<[1], [0], [0], [1], [0, 0, 1, 1], [], []>} : vector<256x256xbf16>, vector<256x256xbf16>, vector<256x256xf32> -> vector<256x256xf32>
    %c0_4 = arith.constant 0 : index
    %c0_5 = arith.constant 0 : index
    %4 = vector.load %arg4[%c0_4, %c0_5] : memref<256x1xf32, #tpu.memory_space<vmem>>, vector<256x1xf32>
    %5 = vector.broadcast %4 : vector<256x1xf32> to vector<256x256xf32>
    %6 = arith.addf %3, %5 : vector<256x256xf32>
    %cst_6 = arith.constant 0.000000e+00 : f32
    %7 = vector.broadcast %cst_6 : f32 to vector<256x256xf32>
    %8 = arith.maximumf %6, %7 : vector<256x256xf32>
    %9 = arith.truncf %8 : vector<256x256xf32> to vector<256x256xbf16>
    %c0_7 = arith.constant 0 : index
    %c0_8 = arith.constant 0 : index
    %10 = vector.load %arg5[%c0_7, %c0_8] : memref<128x256xbf16, #tpu.memory_space<vmem>>, vector<128x256xbf16>
    %cst_9 = arith.constant dense<0.000000e+00> : vector<128x256xf32>
    %11 = tpu.matmul %10, %9, %cst_9 {dimension_numbers = #tpu.dot_dimension_numbers<[1], [0], [0], [1], [0, 0, 1, 1], [], []>} : vector<128x256xbf16>, vector<256x256xbf16>, vector<128x256xf32> -> vector<128x256xf32>
    %c0_10 = arith.constant 0 : index
    %c0_11 = arith.constant 0 : index
    %12 = vector.load %arg6[%c0_10, %c0_11] : memref<128x1xf32, #tpu.memory_space<vmem>>, vector<128x1xf32>
    %13 = vector.broadcast %12 : vector<128x1xf32> to vector<128x256xf32>
    %14 = arith.addf %11, %13 : vector<128x256xf32>
    %cst_12 = arith.constant 0.000000e+00 : f32
    %15 = vector.broadcast %cst_12 : f32 to vector<128x256xf32>
    %16 = arith.maximumf %14, %15 : vector<128x256xf32>
    %17 = arith.truncf %16 : vector<128x256xf32> to vector<128x256xbf16>
    %c0_13 = arith.constant 0 : index
    %c0_14 = arith.constant 0 : index
    %18 = vector.load %arg7[%c0_13, %c0_14] : memref<128x128xbf16, #tpu.memory_space<vmem>>, vector<128x128xbf16>
    %cst_15 = arith.constant dense<0.000000e+00> : vector<128x256xf32>
    %19 = tpu.matmul %18, %17, %cst_15 {dimension_numbers = #tpu.dot_dimension_numbers<[1], [0], [0], [1], [0, 0, 1, 1], [], []>} : vector<128x128xbf16>, vector<128x256xbf16>, vector<128x256xf32> -> vector<128x256xf32>
    %c0_16 = arith.constant 0 : index
    %c0_17 = arith.constant 0 : index
    %20 = vector.load %arg8[%c0_16, %c0_17] : memref<128x1xf32, #tpu.memory_space<vmem>>, vector<128x1xf32>
    %21 = vector.broadcast %20 : vector<128x1xf32> to vector<128x256xf32>
    %22 = arith.addf %19, %21 : vector<128x256xf32>
    %cst_18 = arith.constant 0.000000e+00 : f32
    %23 = vector.broadcast %cst_18 : f32 to vector<128x256xf32>
    %24 = arith.maximumf %22, %23 : vector<128x256xf32>
    %25 = arith.truncf %24 : vector<128x256xf32> to vector<128x256xbf16>
    %c0_19 = arith.constant 0 : index
    %c0_20 = arith.constant 0 : index
    %26 = vector.load %arg9[%c0_19, %c0_20] : memref<128x128xbf16, #tpu.memory_space<vmem>>, vector<128x128xbf16>
    %cst_21 = arith.constant dense<0.000000e+00> : vector<128x256xf32>
    %27 = tpu.matmul %26, %25, %cst_21 {dimension_numbers = #tpu.dot_dimension_numbers<[1], [0], [0], [1], [0, 0, 1, 1], [], []>} : vector<128x128xbf16>, vector<128x256xbf16>, vector<128x256xf32> -> vector<128x256xf32>
    %c0_22 = arith.constant 0 : index
    %c0_23 = arith.constant 0 : index
    %28 = vector.load %arg10[%c0_22, %c0_23] : memref<128x1xf32, #tpu.memory_space<vmem>>, vector<128x1xf32>
    %29 = vector.broadcast %28 : vector<128x1xf32> to vector<128x256xf32>
    %30 = arith.addf %27, %29 : vector<128x256xf32>
    %31 = arith.truncf %30 : vector<128x256xf32> to vector<128x256xbf16>
    %c0_24 = arith.constant 0 : index
    %c0_25 = arith.constant 0 : index
    %c0_26 = arith.constant 0 : index
    %32 = vector.load %arg11[%c0_24, %c0_25, %c0_26] : memref<1x128x256xbf16, #tpu.memory_space<vmem>>, vector<1x128x256xbf16>
    %33 = vector.shape_cast %32 : vector<1x128x256xbf16> to vector<128x256xbf16>
    %34 = vector.shape_cast %31 : vector<128x256xbf16> to vector<1x128x256xbf16>
    tpu.vector_store %arg11[%c0_24, %c0_25, %c0_26], %34 {strides = array<i32>} : memref<1x128x256xbf16, #tpu.memory_space<vmem>>, vector<1x128x256xbf16>,
    return
  }
  func.func @transform_0(%arg0: i32, %arg1: i32) -> (i32, i32, i32) {
    %c0_i32 = arith.constant 0 : i32
    %c0_i32_0 = arith.constant 0 : i32
    return %arg0, %c0_i32, %arg1 : i32, i32, i32
  }
  func.func @transform_1(%arg0: i32, %arg1: i32) -> (i32, i32) {
    %c0_i32 = arith.constant 0 : i32
    %c0_i32_0 = arith.constant 0 : i32
    %c0_i32_1 = arith.constant 0 : i32
    return %c0_i32, %c0_i32_0 : i32, i32
  }
  func.func @transform_2(%arg0: i32, %arg1: i32) -> (i32, i32) {
    %c0_i32 = arith.constant 0 : i32
    %c0_i32_0 = arith.constant 0 : i32
    %c0_i32_1 = arith.constant 0 : i32
    return %c0_i32, %c0_i32_0 : i32, i32
  }
  func.func @transform_3(%arg0: i32, %arg1: i32) -> (i32, i32) {
    %c0_i32 = arith.constant 0 : i32
    %c0_i32_0 = arith.constant 0 : i32
    %c0_i32_1 = arith.constant 0 : i32
    return %c0_i32, %c0_i32_0 : i32, i32
  }
  func.func @transform_4(%arg0: i32, %arg1: i32) -> (i32, i32) {
    %c0_i32 = arith.constant 0 : i32
    %c0_i32_0 = arith.constant 0 : i32
    %c0_i32_1 = arith.constant 0 : i32
    return %c0_i32, %c0_i32_0 : i32, i32
  }
  func.func @transform_5(%arg0: i32, %arg1: i32) -> (i32, i32) {
    %c0_i32 = arith.constant 0 : i32
    %c0_i32_0 = arith.constant 0 : i32
    %c0_i32_1 = arith.constant 0 : i32
    return %c0_i32, %c0_i32_0 : i32, i32
  }
  func.func @transform_6(%arg0: i32, %arg1: i32) -> (i32, i32) {
    %c0_i32 = arith.constant 0 : i32
    %c0_i32_0 = arith.constant 0 : i32
    %c0_i32_1 = arith.constant 0 : i32
    return %c0_i32, %c0_i32_0 : i32, i32
  }
  func.func @transform_7(%arg0: i32, %arg1: i32) -> (i32, i32) {
    %c0_i32 = arith.constant 0 : i32
    %c0_i32_0 = arith.constant 0 : i32
    %c0_i32_1 = arith.constant 0 : i32
    return %c0_i32, %c0_i32_0 : i32, i32
  }
  func.func @transform_8(%arg0: i32, %arg1: i32) -> (i32, i32) {
    %c0_i32 = arith.constant 0 : i32
    %c0_i32_0 = arith.constant 0 : i32
    %c0_i32_1 = arith.constant 0 : i32
    return %c0_i32, %c0_i32_0 : i32, i32
  }
  func.func @transform_9(%arg0: i32, %arg1: i32) -> (i32, i32, i32) {
    %c0_i32 = arith.constant 0 : i32
    %c0_i32_0 = arith.constant 0 : i32
    return %arg0, %c0_i32, %arg1 : i32, i32, i32
  }
}

</mosaic_0001>

<llo_original>
// kernel: tpu_custom_call.1
$region0: #{tpu_custom_call.1}
  #allocation0 [shape = 'u32[]', space=smem, size = 0x4, offset = 0x4, fixed_abs, tag = 'smem constant byte address 0x4 - core index']
  #allocation1 [shape = 'u32[144,128]{1,0:T(1,128)}', space=vmem, size = 0x12000, scoped, tag = 'internal scratch']
  %s0 = inlined_call_operand.hbm [shape: bf16[2,256,512], index: 0, kind: input, shape index: {}]
  %s1 = inlined_call_operand.vmem [shape: bf16[256,256], index: 1, kind: input, shape index: {}]
  %s2 = inlined_call_operand.vmem [shape: f32[256,1], index: 2, kind: input, shape index: {}]
  %s3 = inlined_call_operand.vmem [shape: bf16[128,256], index: 3, kind: input, shape index: {}]
  %s4 = inlined_call_operand.vmem [shape: f32[128,1], index: 4, kind: input, shape index: {}]
  %s5 = inlined_call_operand.vmem [shape: bf16[128,128], index: 5, kind: input, shape index: {}]
  %s6 = inlined_call_operand.vmem [shape: f32[128,1], index: 6, kind: input, shape index: {}]
  %s7 = inlined_call_operand.vmem [shape: bf16[128,128], index: 7, kind: input, shape index: {}]
  %s8 = inlined_call_operand.vmem [shape: f32[128,1], index: 8, kind: input, shape index: {}]
  %s9 = inlined_call_operand.hbm [shape: bf16[2,128,512], index: 9, kind: output, shape index: {}]
  %s10 = sld [smem:[#allocation0]]
  $region73: #{tpu_custom_call.1} parent=0
    _
  %s12 = ssub.s32 1, %s10
  %s13 = scalar_select 0, %s12, %s10
  $region1: #{tpu_custom_call.1} parent=0
    #allocation2 [shape = 'u8[262144]{0}', space=vmem, size = 0x40000, scoped, tag = 'input window, operand 0']
    #allocation3 [shape = 's32[2]{0}', space=sflag, size = 0x8, scoped, tag = 'scoped memory for tpu_custom_call.1']
    #allocation4 [shape = 's32[2]{0}', space=sflag, size = 0x8, scoped, tag = 'scoped memory for tpu_custom_call.1']
    #allocation5 [shape = 'u8[131072]{0}', space=vmem, size = 0x20000, scoped, tag = 'output window, operand 0']
    %14 = vsyncpa [#allocation3], 0
    %s15 = scalar_lea.sflag [#allocation3], 1
    %16 = vsyncpa %s15, 0
    %17 = vsyncpa [#allocation4], 0
    %s18 = scalar_lea.sflag [#allocation4], 1
    %19 = vsyncpa %s18, 0
    loop: start=0, step=1, limit=6
    $region2: #{tpu_custom_call.1} parent=1 // loop_pre_header
      _
    $region3: #{tpu_custom_call.1} parent=1 // loop_header
      %s21 = sphi 0, %s25
      %p22 = scmp.ge.s32.totalorder %s21, 6
      %s28 = sphi 0, %s40
      %s29 = sphi 0, %s36
      %s30 = sphi 0, %s28
      %s31 = sphi 0, %s29
      %s32 = sphi 0, %s30
      %s33 = sphi 0, %s31
      %s45 = sphi 0, %s47
      %s48 = sphi 0, %s45
      %s49 = sphi 0, %s48
      %s65 = sphi 0, %s49
      %s69 = sphi 0, %s69
      %s71 = sphi 0, %s69
      %s72 = sphi 0, %s71
      %s86 = sphi 0, %s72
      %s90 = sphi 0, %s90
      %s92 = sphi 0, %s90
      %s93 = sphi 0, %s92
      %s107 = sphi 0, %s93
      %s111 = sphi 0, %s111
      %s113 = sphi 0, %s111
      %s114 = sphi 0, %s113
      %s128 = sphi 0, %s114
      %s132 = sphi 0, %s132
      %s134 = sphi 0, %s132
      %s135 = sphi 0, %s134
      %s149 = sphi 0, %s135
      %s153 = sphi 0, %s153
      %s155 = sphi 0, %s153
      %s156 = sphi 0, %s155
      %s170 = sphi 0, %s156
      %s174 = sphi 0, %s174
      %s176 = sphi 0, %s174
      %s177 = sphi 0, %s176
      %s191 = sphi 0, %s177
      %s195 = sphi 0, %s195
      %s197 = sphi 0, %s195
      %s198 = sphi 0, %s197
      %s212 = sphi 0, %s198
      %s216 = sphi 0, %s216
      %s218 = sphi 0, %s216
      %s219 = sphi 0, %s218
      %s233 = sphi 0, %s219
      %s241 = sphi 0, %s243
      %s244 = sphi 0, %s241
      %s245 = sphi 0, %s244
      %s261 = sphi 0, %s245
    $region4: #{tpu_custom_call.1} parent=1 // loop_header_branch
      %24 = sbr.rel (%p22) target = $region8
    $region5: #{tpu_custom_call.1} parent=1 // loop_body
      %s26 = ssub.s32 %s21, 1
      %s27 = ssub.s32 %s21, 2
      %s34 = sadd.s32 1, %s29
      %p35 = scmp.ge.s32.totalorder %s34, 2
      %s36 = scalar_select %p35, 0, %s34
      %s37 = sadd.s32 1, %s28
      %s38 = scalar_select %p35, %s37, %s28
      %p39 = scmp.ge.s32.totalorder %s38, 2
      %s40 = scalar_select %p39, 0, %s38
      %s41 = ssub.s32 %s28, %s40
      %s42 = ssub.s32 %s29, %s36
      %s43 = sor.u32 %s41, %s42
      %p44 = scmp.eq.s32.totalorder %s43, 0
      %s46 = sadd.s32 %s45, 1
      %s47 = scalar_select %p44, %s45, %s46
      %p50 = pneg %p44
      %p51 = scmp.eq.s32.totalorder %s21, 3
      %p52 = por %p50, %p51
      %p53 = scmp.ne.s32.totalorder %s45, %s48
      %p54 = scmp.eq.s32.totalorder %s21, 0
      %p55 = por %p53, %p54
      %p56 = scmp.ne.s32.totalorder %s45, %s48
      %p57 = scmp.eq.s32.totalorder %s26, 3
      %p58 = por %p56, %p57
      %p59 = scmp.ne.s32.totalorder %s48, %s49
      %p60 = scmp.eq.s32.totalorder %s26, 0
      %p61 = por %p59, %p60
      %p62 = scmp.ne.s32.totalorder %s48, %s49
      %p63 = scmp.eq.s32.totalorder %s27, 3
      %p64 = por %p62, %p63
      %p66 = scmp.ne.s32.totalorder %s49, %s65
      %p67 = scmp.eq.s32.totalorder %s27, 0
      %p68 = por %p66, %p67
      %s70 = sadd.s32 %s69, 1
      %p73 = scmp.eq.s32.totalorder %s21, 3
      %p74 = scmp.ne.s32.totalorder %s69, %s71
      %p75 = scmp.eq.s32.totalorder %s21, 0
      %p76 = por %p74, %p75
      %p77 = scmp.ne.s32.totalorder %s69, %s71
      %p78 = scmp.eq.s32.totalorder %s26, 3
      %p79 = por %p77, %p78
      %p80 = scmp.ne.s32.totalorder %s71, %s72
      %p81 = scmp.eq.s32.totalorder %s26, 0
      %p82 = por %p80, %p81
      %p83 = scmp.ne.s32.totalorder %s71, %s72
      %p84 = scmp.eq.s32.totalorder %s27, 3
      %p85 = por %p83, %p84
      %p87 = scmp.ne.s32.totalorder %s72, %s86
      %p88 = scmp.eq.s32.totalorder %s27, 0
      %p89 = por %p87, %p88
      %s91 = sadd.s32 %s90, 1
      %p94 = scmp.eq.s32.totalorder %s21, 3
      %p95 = scmp.ne.s32.totalorder %s90, %s92
      %p96 = scmp.eq.s32.totalorder %s21, 0
      %p97 = por %p95, %p96
      %p98 = scmp.ne.s32.totalorder %s90, %s92
      %p99 = scmp.eq.s32.totalorder %s26, 3
      %p100 = por %p98, %p99
      %p101 = scmp.ne.s32.totalorder %s92, %s93
      %p102 = scmp.eq.s32.totalorder %s26, 0
      %p103 = por %p101, %p102
      %p104 = scmp.ne.s32.totalorder %s92, %s93
      %p105 = scmp.eq.s32.totalorder %s27, 3
      %p106 = por %p104, %p105
      %p108 = scmp.ne.s32.totalorder %s93, %s107
      %p109 = scmp.eq.s32.totalorder %s27, 0
      %p110 = por %p108, %p109
      %s112 = sadd.s32 %s111, 1
      %p115 = scmp.eq.s32.totalorder %s21, 3
      %p116 = scmp.ne.s32.totalorder %s111, %s113
      %p117 = scmp.eq.s32.totalorder %s21, 0
      %p118 = por %p116, %p117
      %p119 = scmp.ne.s32.totalorder %s111, %s113
      %p120 = scmp.eq.s32.totalorder %s26, 3
      %p121 = por %p119, %p120
      %p122 = scmp.ne.s32.totalorder %s113, %s114
      %p123 = scmp.eq.s32.totalorder %s26, 0
      %p124 = por %p122, %p123
      %p125 = scmp.ne.s32.totalorder %s113, %s114
      %p126 = scmp.eq.s32.totalorder %s27, 3
      %p127 = por %p125, %p126
      %p129 = scmp.ne.s32.totalorder %s114, %s128
      %p130 = scmp.eq.s32.totalorder %s27, 0
      %p131 = por %p129, %p130
      %s133 = sadd.s32 %s132, 1
      %p136 = scmp.eq.s32.totalorder %s21, 3
      %p137 = scmp.ne.s32.totalorder %s132, %s134
      %p138 = scmp.eq.s32.totalorder %s21, 0
      %p139 = por %p137, %p138
      %p140 = scmp.ne.s32.totalorder %s132, %s134
      %p141 = scmp.eq.s32.totalorder %s26, 3
      %p142 = por %p140, %p141
      %p143 = scmp.ne.s32.totalorder %s134, %s135
      %p144 = scmp.eq.s32.totalorder %s26, 0
      %p145 = por %p143, %p144
      %p146 = scmp.ne.s32.totalorder %s134, %s135
      %p147 = scmp.eq.s32.totalorder %s27, 3
      %p148 = por %p146, %p147
      %p150 = scmp.ne.s32.totalorder %s135, %s149
      %p151 = scmp.eq.s32.totalorder %s27, 0
      %p152 = por %p150, %p151
      %s154 = sadd.s32 %s153, 1
      %p157 = scmp.eq.s32.totalorder %s21, 3
      %p158 = scmp.ne.s32.totalorder %s153, %s155
      %p159 = scmp.eq.s32.totalorder %s21, 0
      %p160 = por %p158, %p159
      %p161 = scmp.ne.s32.totalorder %s153, %s155
      %p162 = scmp.eq.s32.totalorder %s26, 3
      %p163 = por %p161, %p162
      %p164 = scmp.ne.s32.totalorder %s155, %s156
      %p165 = scmp.eq.s32.totalorder %s26, 0
      %p166 = por %p164, %p165
      %p167 = scmp.ne.s32.totalorder %s155, %s156
      %p168 = scmp.eq.s32.totalorder %s27, 3
      %p169 = por %p167, %p168
      %p171 = scmp.ne.s32.totalorder %s156, %s170
      %p172 = scmp.eq.s32.totalorder %s27, 0
      %p173 = por %p171, %p172
      %s175 = sadd.s32 %s174, 1
      %p178 = scmp.eq.s32.totalorder %s21, 3
      %p179 = scmp.ne.s32.totalorder %s174, %s176
      %p180 = scmp.eq.s32.totalorder %s21, 0
      %p181 = por %p179, %p180
      %p182 = scmp.ne.s32.totalorder %s174, %s176
      %p183 = scmp.eq.s32.totalorder %s26, 3
      %p184 = por %p182, %p183
      %p185 = scmp.ne.s32.totalorder %s176, %s177
      %p186 = scmp.eq.s32.totalorder %s26, 0
      %p187 = por %p185, %p186
      %p188 = scmp.ne.s32.totalorder %s176, %s177
      %p189 = scmp.eq.s32.totalorder %s27, 3
      %p190 = por %p188, %p189
      %p192 = scmp.ne.s32.totalorder %s177, %s191
      %p193 = scmp.eq.s32.totalorder %s27, 0
      %p194 = por %p192, %p193
      %s196 = sadd.s32 %s195, 1
      %p199 = scmp.eq.s32.totalorder %s21, 3
      %p200 = scmp.ne.s32.totalorder %s195, %s197
      %p201 = scmp.eq.s32.totalorder %s21, 0
      %p202 = por %p200, %p201
      %p203 = scmp.ne.s32.totalorder %s195, %s197
      %p204 = scmp.eq.s32.totalorder %s26, 3
      %p205 = por %p203, %p204
      %p206 = scmp.ne.s32.totalorder %s197, %s198
      %p207 = scmp.eq.s32.totalorder %s26, 0
      %p208 = por %p206, %p207
      %p209 = scmp.ne.s32.totalorder %s197, %s198
      %p210 = scmp.eq.s32.totalorder %s27, 3
      %p211 = por %p209, %p210
      %p213 = scmp.ne.s32.totalorder %s198, %s212
      %p214 = scmp.eq.s32.totalorder %s27, 0
      %p215 = por %p213, %p214
      %s217 = sadd.s32 %s216, 1
      %p220 = scmp.eq.s32.totalorder %s21, 3
      %p221 = scmp.ne.s32.totalorder %s216, %s218
      %p222 = scmp.eq.s32.totalorder %s21, 0
      %p223 = por %p221, %p222
      %p224 = scmp.ne.s32.totalorder %s216, %s218
      %p225 = scmp.eq.s32.totalorder %s26, 3
      %p226 = por %p224, %p225
      %p227 = scmp.ne.s32.totalorder %s218, %s219
      %p228 = scmp.eq.s32.totalorder %s26, 0
      %p229 = por %p227, %p228
      %p230 = scmp.ne.s32.totalorder %s218, %s219
      %p231 = scmp.eq.s32.totalorder %s27, 3
      %p232 = por %p230, %p231
      %p234 = scmp.ne.s32.totalorder %s219, %s233
      %p235 = scmp.eq.s32.totalorder %s27, 0
      %p236 = por %p234, %p235
      %s237 = ssub.s32 %s28, %s40
      %s238 = ssub.s32 %s29, %s36
      %s239 = sor.u32 %s237, %s238
      %p240 = scmp.eq.s32.totalorder %s239, 0
      %s242 = sadd.s32 %s241, 1
      %s243 = scalar_select %p240, %s241, %s242
      %p246 = pneg %p240
      %p247 = scmp.eq.s32.totalorder %s21, 3
      %p248 = por %p246, %p247
      %p249 = scmp.ne.s32.totalorder %s241, %s244
      %p250 = scmp.eq.s32.totalorder %s21, 0
      %p251 = por %p249, %p250
      %p252 = scmp.ne.s32.totalorder %s241, %s244
      %p253 = scmp.eq.s32.totalorder %s26, 3
      %p254 = por %p252, %p253
      %p255 = scmp.ne.s32.totalorder %s244, %s245
      %p256 = scmp.eq.s32.totalorder %s26, 0
      %p257 = por %p255, %p256
      %p258 = scmp.ne.s32.totalorder %s244, %s245
      %p259 = scmp.eq.s32.totalorder %s27, 3
      %p260 = por %p258, %p259
      %p262 = scmp.ne.s32.totalorder %s245, %s261
      %p263 = scmp.eq.s32.totalorder %s27, 0
      %p264 = por %p262, %p263
      %p265 = scmp.le.s32.totalorder 1, %s21
      %p266 = scmp.lt.s32.totalorder %s21, 5
      %p267 = pnand %p265, %p266
      %p268 = pneg %p267
      // Predicated region
      $region9: #{tpu_custom_call.1} parent=5 // pred_check
        _
      $region10: #{tpu_custom_call.1} parent=5 // pred_check_branch
        %270 = sbr.rel (%p267) target = $region12
      $region11: #{tpu_custom_call.1} parent=5 // pred_region
        %s271 = ssub.s32 %s21, 1
        // Predicated region
        $region13: #{tpu_custom_call.1} parent=11 // pred_check
          %p272 = pneg %p82
        $region14: #{tpu_custom_call.1} parent=11 // pred_check_branch
          %274 = sbr.rel (%p272) target = $region16
        $region15: #{tpu_custom_call.1} parent=11 // pred_region
          _
        $region16: #{tpu_custom_call.1} parent=11 // pred_fallthru
          _
        // Predicated region
        $region17: #{tpu_custom_call.1} parent=11 // pred_check
          %p275 = pneg %p103
        $region18: #{tpu_custom_call.1} parent=11 // pred_check_branch
          %277 = sbr.rel (%p275) target = $region20
        $region19: #{tpu_custom_call.1} parent=11 // pred_region
          _
        $region20: #{tpu_custom_call.1} parent=11 // pred_fallthru
          _
        // Predicated region
        $region21: #{tpu_custom_call.1} parent=11 // pred_check
          %p278 = pneg %p124
        $region22: #{tpu_custom_call.1} parent=11 // pred_check_branch
          %280 = sbr.rel (%p278) target = $region24
        $region23: #{tpu_custom_call.1} parent=11 // pred_region
          _
        $region24: #{tpu_custom_call.1} parent=11 // pred_fallthru
          _
        // Predicated region
        $region25: #{tpu_custom_call.1} parent=11 // pred_check
          %p281 = pneg %p145
        $region26: #{tpu_custom_call.1} parent=11 // pred_check_branch
          %283 = sbr.rel (%p281) target = $region28
        $region27: #{tpu_custom_call.1} parent=11 // pred_region
          _
        $region28: #{tpu_custom_call.1} parent=11 // pred_fallthru
          _
        // Predicated region
        $region29: #{tpu_custom_call.1} parent=11 // pred_check
          %p284 = pneg %p166
        $region30: #{tpu_custom_call.1} parent=11 // pred_check_branch
          %286 = sbr.rel (%p284) target = $region32
        $region31: #{tpu_custom_call.1} parent=11 // pred_region
          _
        $region32: #{tpu_custom_call.1} parent=11 // pred_fallthru
          _
        // Predicated region
        $region33: #{tpu_custom_call.1} parent=11 // pred_check
          %p287 = pneg %p187
        $region34: #{tpu_custom_call.1} parent=11 // pred_check_branch
          %289 = sbr.rel (%p287) target = $region36
        $region35: #{tpu_custom_call.1} parent=11 // pred_region
          _
        $region36: #{tpu_custom_call.1} parent=11 // pred_fallthru
          _
        // Predicated region
        $region37: #{tpu_custom_call.1} parent=11 // pred_check
          %p290 = pneg %p208
        $region38: #{tpu_custom_call.1} parent=11 // pred_check_branch
          %292 = sbr.rel (%p290) target = $region40
        $region39: #{tpu_custom_call.1} parent=11 // pred_region
          _
        $region40: #{tpu_custom_call.1} parent=11 // pred_fallthru
          _
        // Predicated region
        $region41: #{tpu_custom_call.1} parent=11 // pred_check
          %p293 = pneg %p229
        $region42: #{tpu_custom_call.1} parent=11 // pred_check_branch
          %295 = sbr.rel (%p293) target = $region44
        $region43: #{tpu_custom_call.1} parent=11 // pred_region
          _
        $region44: #{tpu_custom_call.1} parent=11 // pred_fallthru
          _
      $region12: #{tpu_custom_call.1} parent=5 // pred_fallthru
        _
      %p296 = scmp.lt.s32.totalorder %s21, 4
      // Predicated region
      $region45: #{tpu_custom_call.1} parent=5 // pred_check
        %p297 = pneg %p296
      $region46: #{tpu_custom_call.1} parent=5 // pred_check_branch
        %299 = sbr.rel (%p297) target = $region48
      $region47: #{tpu_custom_call.1} parent=5 // pred_region
        // Predicated region
        $region49: #{tpu_custom_call.1} parent=47 // pred_check
          %p300 = pneg %p55
        $region50: #{tpu_custom_call.1} parent=47 // pred_check_branch
          %302 = sbr.rel (%p300) target = $region52
        $region51: #{tpu_custom_call.1} parent=47 // pred_region
          %s303 = sand.u32 %s45, 1
          %s304 = scalar_lea.sflag [#allocation3], %s303
          %s305 = sand.u32 %s45, 1
          %s306 = smul.addr %s305, 256
          %s307 = scalar_lea.vmem [#allocation2], %s306
          %s308 = smul.u32 2, %s29
          %s310 = ssub.s32 4096, 4096
          %311 = vsyncadd %s304, %s310
          %s312 = smul.addr %s28, 128
          %s313 = sadd.s32 %s308, %s312
          %s314 = smul.addr %s313, 64
          %s315 = scalar_lea.hbm %s0, %s314
          %s316 = sshll.u32 %s307, 4
          %s317 = int_to_ptr.vmem [resolvable:$true] %s316
          %322 = dma.hbm_to_vmem [thread:$0]  %s315, 4096, %s317, %s304, 256, 128, 8
        $region52: #{tpu_custom_call.1} parent=47 // pred_fallthru
          _
      $region48: #{tpu_custom_call.1} parent=5 // pred_fallthru
        _
      %p323 = scmp.le.s32.totalorder 1, %s21
      %p324 = scmp.lt.s32.totalorder %s21, 5
      %p325 = pnand %p323, %p324
      %p326 = pneg %p325
      // Predicated region
      $region53: #{tpu_custom_call.1} parent=5 // pred_check
        _
      $region54: #{tpu_custom_call.1} parent=5 // pred_check_branch
        %328 = sbr.rel (%p325) target = $region56
      $region55: #{tpu_custom_call.1} parent=5 // pred_region
        %s329 = ssub.s32 %s21, 1
        %s330 = sand.u32 %s48, 1
        %s331 = scalar_lea.sflag [#allocation3], %s330
        %s332 = sand.u32 %s48, 1
        %s333 = smul.addr %s332, 256
        %s334 = scalar_lea.vmem [#allocation2], %s333
        // Predicated region
        $region57: #{tpu_custom_call.1} parent=55 // pred_check
          %p335 = pneg %p61
        $region58: #{tpu_custom_call.1} parent=55 // pred_check_branch
          %337 = sbr.rel (%p335) target = $region60
        $region59: #{tpu_custom_call.1} parent=55 // pred_region
          %338 = dma.done %s331, 4096
        $region60: #{tpu_custom_call.1} parent=55 // pred_fallthru
          _
        %s339 = sand.u32 %s48, 1
        %s340 = scalar_lea.sflag [#allocation3], %s339
        %s341 = sand.u32 %s48, 1
        %s342 = smul.addr %s341, 256
        %s343 = scalar_lea.vmem [#allocation2], %s342
        %p344 = pneg %p61
        %p345 = pneg %p58
        %p346 = pneg %p82
        %p347 = pneg %p79
        %p348 = pneg %p103
        %p349 = pneg %p100
        %p350 = pneg %p124
        %p351 = pneg %p121
        %p352 = pneg %p145
        %p353 = pneg %p142
        %p354 = pneg %p166
        %p355 = pneg %p163
        %p356 = pneg %p187
        %p357 = pneg %p184
        %p358 = pneg %p208
        %p359 = pneg %p205
        %p360 = pneg %p229
        %p361 = pneg %p226
        %p362 = pneg %p257
        %p363 = pneg %p254
        %s364 = sand.u32 %s244, 1
        %s365 = scalar_lea.sflag [#allocation4], %s364
        %s366 = sand.u32 %s244, 1
        %s367 = smul.addr %s366, 128
        %s368 = scalar_lea.vmem [#allocation5], %s367
        %s369 = smul.u32 2, %s31
        %s370 = smul.u32 2, %s31
        %v372 = vld [vmem:[%s334] sm:$0xff]
        %v373 = vld [vmem:[%s334 + $0x8] sm:$0xff]
        %v374 = vld [vmem:[%s334 + $0x10] sm:$0xff]
        %v375 = vld [vmem:[%s334 + $0x18] sm:$0xff]
        %v376 = vld [vmem:[%s334 + $0x20] sm:$0xff]
        %v377 = vld [vmem:[%s334 + $0x28] sm:$0xff]
        %v378 = vld [vmem:[%s334 + $0x30] sm:$0xff]
        %v379 = vld [vmem:[%s334 + $0x38] sm:$0xff]
        %v380 = vld [vmem:[%s334 + $0x40] sm:$0xff]
        %v381 = vld [vmem:[%s334 + $0x48] sm:$0xff]
        %v382 = vld [vmem:[%s334 + $0x50] sm:$0xff]
        %v383 = vld [vmem:[%s334 + $0x58] sm:$0xff]
        %v384 = vld [vmem:[%s334 + $0x60] sm:$0xff]
        %v385 = vld [vmem:[%s334 + $0x68] sm:$0xff]
        %v386 = vld [vmem:[%s334 + $0x70] sm:$0xff]
        %v387 = vld [vmem:[%s334 + $0x78] sm:$0xff]
        %v388 = vld [vmem:[%s334 + $0x80] sm:$0xff]
        %v389 = vld [vmem:[%s334 + $0x88] sm:$0xff]
        %v390 = vld [vmem:[%s334 + $0x90] sm:$0xff]
        %v391 = vld [vmem:[%s334 + $0x98] sm:$0xff]
        %v392 = vld [vmem:[%s334 + $0xa0] sm:$0xff]
        %v393 = vld [vmem:[%s334 + $0xa8] sm:$0xff]
        %v394 = vld [vmem:[%s334 + $0xb0] sm:$0xff]
        %v395 = vld [vmem:[%s334 + $0xb8] sm:$0xff]
        %v396 = vld [vmem:[%s334 + $0xc0] sm:$0xff]
        %v397 = vld [vmem:[%s334 + $0xc8] sm:$0xff]
        %v398 = vld [vmem:[%s334 + $0xd0] sm:$0xff]
        %v399 = vld [vmem:[%s334 + $0xd8] sm:$0xff]
        %v400 = vld [vmem:[%s334 + $0xe0] sm:$0xff]
        %v401 = vld [vmem:[%s334 + $0xe8] sm:$0xff]
        %v402 = vld [vmem:[%s334 + $0xf0] sm:$0xff]
        %v403 = vld [vmem:[%s334 + $0xf8] sm:$0xff]
        %v404 = vld [vmem:[%s1] sm:$0xff]
        %v405 = vld [vmem:[%s1 + $0x8] sm:$0xff]
        %v406 = vld [vmem:[%s1 + $0x10] sm:$0xff]
        %v407 = vld [vmem:[%s1 + $0x18] sm:$0xff]
        %v408 = vld [vmem:[%s1 + $0x20] sm:$0xff]
        %v409 = vld [vmem:[%s1 + $0x28] sm:$0xff]
        %v410 = vld [vmem:[%s1 + $0x30] sm:$0xff]
        %v411 = vld [vmem:[%s1 + $0x38] sm:$0xff]
        %v412 = vld [vmem:[%s1 + $0x40] sm:$0xff]
        %v413 = vld [vmem:[%s1 + $0x48] sm:$0xff]
        %v414 = vld [vmem:[%s1 + $0x50] sm:$0xff]
        %v415 = vld [vmem:[%s1 + $0x58] sm:$0xff]
        %v416 = vld [vmem:[%s1 + $0x60] sm:$0xff]
        %v417 = vld [vmem:[%s1 + $0x68] sm:$0xff]
        %v418 = vld [vmem:[%s1 + $0x70] sm:$0xff]
        %v419 = vld [vmem:[%s1 + $0x78] sm:$0xff]
        %v420 = vld [vmem:[%s1 + $0x80] sm:$0xff]
        %v421 = vld [vmem:[%s1 + $0x88] sm:$0xff]
        %v422 = vld [vmem:[%s1 + $0x90] sm:$0xff]
        %v423 = vld [vmem:[%s1 + $0x98] sm:$0xff]
        %v424 = vld [vmem:[%s1 + $0xa0] sm:$0xff]
        %v425 = vld [vmem:[%s1 + $0xa8] sm:$0xff]
        %v426 = vld [vmem:[%s1 + $0xb0] sm:$0xff]
        %v427 = vld [vmem:[%s1 + $0xb8] sm:$0xff]
        %v428 = vld [vmem:[%s1 + $0xc0] sm:$0xff]
        %v429 = vld [vmem:[%s1 + $0xc8] sm:$0xff]
        %v430 = vld [vmem:[%s1 + $0xd0] sm:$0xff]
        %v431 = vld [vmem:[%s1 + $0xd8] sm:$0xff]
        %v432 = vld [vmem:[%s1 + $0xe0] sm:$0xff]
        %v433 = vld [vmem:[%s1 + $0xe8] sm:$0xff]
        %v434 = vld [vmem:[%s1 + $0xf0] sm:$0xff]
        %v435 = vld [vmem:[%s1 + $0xf8] sm:$0xff]
        %v436 = vld [vmem:[%s2] sm:$0xff]
        %v437 = vld [vmem:[%s2 + $0x8] sm:$0xff]
        %v438 = vld [vmem:[%s2 + $0x10] sm:$0xff]
        %v439 = vld [vmem:[%s2 + $0x18] sm:$0xff]
        %v440 = vld [vmem:[%s2 + $0x20] sm:$0xff]
        %v441 = vld [vmem:[%s2 + $0x28] sm:$0xff]
        %v442 = vld [vmem:[%s2 + $0x30] sm:$0xff]
        %v443 = vld [vmem:[%s2 + $0x38] sm:$0xff]
        %v444 = vld [vmem:[%s2 + $0x40] sm:$0xff]
        %v445 = vld [vmem:[%s2 + $0x48] sm:$0xff]
        %v446 = vld [vmem:[%s2 + $0x50] sm:$0xff]
        %v447 = vld [vmem:[%s2 + $0x58] sm:$0xff]
        %v448 = vld [vmem:[%s2 + $0x60] sm:$0xff]
        %v449 = vld [vmem:[%s2 + $0x68] sm:$0xff]
        %v450 = vld [vmem:[%s2 + $0x70] sm:$0xff]
        %v451 = vld [vmem:[%s2 + $0x78] sm:$0xff]
        %v452 = vld [vmem:[%s2 + $0x80] sm:$0xff]
        %v453 = vld [vmem:[%s2 + $0x88] sm:$0xff]
        %v454 = vld [vmem:[%s2 + $0x90] sm:$0xff]
        %v455 = vld [vmem:[%s2 + $0x98] sm:$0xff]
        %v456 = vld [vmem:[%s2 + $0xa0] sm:$0xff]
        %v457 = vld [vmem:[%s2 + $0xa8] sm:$0xff]
        %v458 = vld [vmem:[%s2 + $0xb0] sm:$0xff]
        %v459 = vld [vmem:[%s2 + $0xb8] sm:$0xff]
        %v460 = vld [vmem:[%s2 + $0xc0] sm:$0xff]
        %v461 = vld [vmem:[%s2 + $0xc8] sm:$0xff]
        %v462 = vld [vmem:[%s2 + $0xd0] sm:$0xff]
        %v463 = vld [vmem:[%s2 + $0xd8] sm:$0xff]
        %v464 = vld [vmem:[%s2 + $0xe0] sm:$0xff]
        %v465 = vld [vmem:[%s2 + $0xe8] sm:$0xff]
        %v466 = vld [vmem:[%s2 + $0xf0] sm:$0xff]
        %v467 = vld [vmem:[%s2 + $0xf8] sm:$0xff]
        %469 = vset.pattern.permute.xlu0 0
        %470 = vperm.xlu0 %469, %v436
        %v471 = vpop.permute.xlu0 %470
        %474 = vset.pattern.permute.xlu0 0
        %475 = vperm.xlu0 %474, %v437
        %v476 = vpop.permute.xlu0 %475
        %479 = vset.pattern.permute.xlu0 0
        %480 = vperm.xlu0 %479, %v438
        %v481 = vpop.permute.xlu0 %480
        %484 = vset.pattern.permute.xlu0 0
        %485 = vperm.xlu0 %484, %v439
        %v486 = vpop.permute.xlu0 %485
        %489 = vset.pattern.permute.xlu0 0
        %490 = vperm.xlu0 %489, %v440
        %v491 = vpop.permute.xlu0 %490
        %494 = vset.pattern.permute.xlu0 0
        %495 = vperm.xlu0 %494, %v441
        %v496 = vpop.permute.xlu0 %495
        %499 = vset.pattern.permute.xlu0 0
        %500 = vperm.xlu0 %499, %v442
        %v501 = vpop.permute.xlu0 %500
        %504 = vset.pattern.permute.xlu0 0
        %505 = vperm.xlu0 %504, %v443
        %v506 = vpop.permute.xlu0 %505
        %509 = vset.pattern.permute.xlu0 0
        %510 = vperm.xlu0 %509, %v444
        %v511 = vpop.permute.xlu0 %510
        %514 = vset.pattern.permute.xlu0 0
        %515 = vperm.xlu0 %514, %v445
        %v516 = vpop.permute.xlu0 %515
        %519 = vset.pattern.permute.xlu0 0
        %520 = vperm.xlu0 %519, %v446
        %v521 = vpop.permute.xlu0 %520
        %524 = vset.pattern.permute.xlu0 0
        %525 = vperm.xlu0 %524, %v447
        %v526 = vpop.permute.xlu0 %525
        %529 = vset.pattern.permute.xlu0 0
        %530 = vperm.xlu0 %529, %v448
        %v531 = vpop.permute.xlu0 %530
        %534 = vset.pattern.permute.xlu0 0
        %535 = vperm.xlu0 %534, %v449
        %v536 = vpop.permute.xlu0 %535
        %539 = vset.pattern.permute.xlu0 0
        %540 = vperm.xlu0 %539, %v450
        %v541 = vpop.permute.xlu0 %540
        %544 = vset.pattern.permute.xlu0 0
        %545 = vperm.xlu0 %544, %v451
        %v546 = vpop.permute.xlu0 %545
        %549 = vset.pattern.permute.xlu0 0
        %550 = vperm.xlu0 %549, %v452
        %v551 = vpop.permute.xlu0 %550
        %554 = vset.pattern.permute.xlu0 0
        %555 = vperm.xlu0 %554, %v453
        %v556 = vpop.permute.xlu0 %555
        %559 = vset.pattern.permute.xlu0 0
        %560 = vperm.xlu0 %559, %v454
        %v561 = vpop.permute.xlu0 %560
        %564 = vset.pattern.permute.xlu0 0
        %565 = vperm.xlu0 %564, %v455
        %v566 = vpop.permute.xlu0 %565
        %569 = vset.pattern.permute.xlu0 0
        %570 = vperm.xlu0 %569, %v456
        %v571 = vpop.permute.xlu0 %570
        %574 = vset.pattern.permute.xlu0 0
        %575 = vperm.xlu0 %574, %v457
        %v576 = vpop.permute.xlu0 %575
        %579 = vset.pattern.permute.xlu0 0
        %580 = vperm.xlu0 %579, %v458
        %v581 = vpop.permute.xlu0 %580
        %584 = vset.pattern.permute.xlu0 0
        %585 = vperm.xlu0 %584, %v459
        %v586 = vpop.permute.xlu0 %585
        %589 = vset.pattern.permute.xlu0 0
        %590 = vperm.xlu0 %589, %v460
        %v591 = vpop.permute.xlu0 %590
        %594 = vset.pattern.permute.xlu0 0
        %595 = vperm.xlu0 %594, %v461
        %v596 = vpop.permute.xlu0 %595
        %599 = vset.pattern.permute.xlu0 0
        %600 = vperm.xlu0 %599, %v462
        %v601 = vpop.permute.xlu0 %600
        %604 = vset.pattern.permute.xlu0 0
        %605 = vperm.xlu0 %604, %v463
        %v606 = vpop.permute.xlu0 %605
        %609 = vset.pattern.permute.xlu0 0
        %610 = vperm.xlu0 %609, %v464
        %v611 = vpop.permute.xlu0 %610
        %614 = vset.pattern.permute.xlu0 0
        %615 = vperm.xlu0 %614, %v465
        %v616 = vpop.permute.xlu0 %615
        %619 = vset.pattern.permute.xlu0 0
        %620 = vperm.xlu0 %619, %v466
        %v621 = vpop.permute.xlu0 %620
        %624 = vset.pattern.permute.xlu0 0
        %625 = vperm.xlu0 %624, %v467
        %v626 = vpop.permute.xlu0 %625
        %v660 = vunpack.c.l.b16 %v404
        %v661 = vunpack.c.h.b16 %v404
        %v662 = vunpack.c.l.b16 %v405
        %v663 = vunpack.c.h.b16 %v405
        %v664 = vunpack.c.l.b16 %v406
        %v665 = vunpack.c.h.b16 %v406
        %v666 = vunpack.c.l.b16 %v407
        %v667 = vunpack.c.h.b16 %v407
        %v668 = vunpack.c.l.b16 %v408
        %v669 = vunpack.c.h.b16 %v408
        %v670 = vunpack.c.l.b16 %v409
        %v671 = vunpack.c.h.b16 %v409
        %v672 = vunpack.c.l.b16 %v410
        %v673 = vunpack.c.h.b16 %v410
        %v674 = vunpack.c.l.b16 %v411
        %v675 = vunpack.c.h.b16 %v411
        %v676 = vunpack.c.l.b16 %v412
        %v677 = vunpack.c.h.b16 %v412
        %v678 = vunpack.c.l.b16 %v413
        %v679 = vunpack.c.h.b16 %v413
        %v680 = vunpack.c.l.b16 %v414
        %v681 = vunpack.c.h.b16 %v414
        %v682 = vunpack.c.l.b16 %v415
        %v683 = vunpack.c.h.b16 %v415
        %v684 = vunpack.c.l.b16 %v416
        %v685 = vunpack.c.h.b16 %v416
        %v686 = vunpack.c.l.b16 %v417
        %v687 = vunpack.c.h.b16 %v417
        %v688 = vunpack.c.l.b16 %v418
        %v689 = vunpack.c.h.b16 %v418
        %v690 = vunpack.c.l.b16 %v419
        %v691 = vunpack.c.h.b16 %v419
        %v692 = vunpack.c.l.b16 %v420
        %v693 = vunpack.c.h.b16 %v420
        %v694 = vunpack.c.l.b16 %v421
        %v695 = vunpack.c.h.b16 %v421
        %v696 = vunpack.c.l.b16 %v422
        %v697 = vunpack.c.h.b16 %v422
        %v698 = vunpack.c.l.b16 %v423
        %v699 = vunpack.c.h.b16 %v423
        %v700 = vunpack.c.l.b16 %v424
        %v701 = vunpack.c.h.b16 %v424
        %v702 = vunpack.c.l.b16 %v425
        %v703 = vunpack.c.h.b16 %v425
        %v704 = vunpack.c.l.b16 %v426
        %v705 = vunpack.c.h.b16 %v426
        %v706 = vunpack.c.l.b16 %v427
        %v707 = vunpack.c.h.b16 %v427
        %v708 = vunpack.c.l.b16 %v428
        %v709 = vunpack.c.h.b16 %v428
        %v710 = vunpack.c.l.b16 %v429
        %v711 = vunpack.c.h.b16 %v429
        %v712 = vunpack.c.l.b16 %v430
        %v713 = vunpack.c.h.b16 %v430
        %v714 = vunpack.c.l.b16 %v431
        %v715 = vunpack.c.h.b16 %v431
        %v716 = vunpack.c.l.b16 %v432
        %v717 = vunpack.c.h.b16 %v432
        %v718 = vunpack.c.l.b16 %v433
        %v719 = vunpack.c.h.b16 %v433
        %v720 = vunpack.c.l.b16 %v434
        %v721 = vunpack.c.h.b16 %v434
        %v722 = vunpack.c.l.b16 %v435
        %v723 = vunpack.c.h.b16 %v435
        %v724 = vpack.c.b16 %v662, %v660
        %v725 = vpack.c.b16 %v663, %v661
        %v726 = vpack.c.b16 %v666, %v664
        %v727 = vpack.c.b16 %v667, %v665
        %v728 = vpack.c.b16 %v670, %v668
        %v729 = vpack.c.b16 %v671, %v669
        %v730 = vpack.c.b16 %v674, %v672
        %v731 = vpack.c.b16 %v675, %v673
        %v732 = vpack.c.b16 %v678, %v676
        %v733 = vpack.c.b16 %v679, %v677
        %v734 = vpack.c.b16 %v682, %v680
        %v735 = vpack.c.b16 %v683, %v681
        %v736 = vpack.c.b16 %v686, %v684
        %v737 = vpack.c.b16 %v687, %v685
        %v738 = vpack.c.b16 %v690, %v688
        %v739 = vpack.c.b16 %v691, %v689
        %v740 = vpack.c.b16 %v694, %v692
        %v741 = vpack.c.b16 %v695, %v693
        %v742 = vpack.c.b16 %v698, %v696
        %v743 = vpack.c.b16 %v699, %v697
        %v744 = vpack.c.b16 %v702, %v700
        %v745 = vpack.c.b16 %v703, %v701
        %v746 = vpack.c.b16 %v706, %v704
        %v747 = vpack.c.b16 %v707, %v705
        %v748 = vpack.c.b16 %v710, %v708
        %v749 = vpack.c.b16 %v711, %v709
        %v750 = vpack.c.b16 %v714, %v712
        %v751 = vpack.c.b16 %v715, %v713
        %v752 = vpack.c.b16 %v718, %v716
        %v753 = vpack.c.b16 %v719, %v717
        %v754 = vpack.c.b16 %v722, %v720
        %v755 = vpack.c.b16 %v723, %v721
        %v820 = vunpack.c.l.b16 %v372
        %v821 = vunpack.c.h.b16 %v372
        %v822 = vunpack.c.l.b16 %v373
        %v823 = vunpack.c.h.b16 %v373
        %v824 = vunpack.c.l.b16 %v374
        %v825 = vunpack.c.h.b16 %v374
        %v826 = vunpack.c.l.b16 %v375
        %v827 = vunpack.c.h.b16 %v375
        %v828 = vunpack.c.l.b16 %v376
        %v829 = vunpack.c.h.b16 %v376
        %v830 = vunpack.c.l.b16 %v377
        %v831 = vunpack.c.h.b16 %v377
        %v832 = vunpack.c.l.b16 %v378
        %v833 = vunpack.c.h.b16 %v378
        %v834 = vunpack.c.l.b16 %v379
        %v835 = vunpack.c.h.b16 %v379
        %v836 = vunpack.c.l.b16 %v380
        %v837 = vunpack.c.h.b16 %v380
        %v838 = vunpack.c.l.b16 %v381
        %v839 = vunpack.c.h.b16 %v381
        %v840 = vunpack.c.l.b16 %v382
        %v841 = vunpack.c.h.b16 %v382
        %v842 = vunpack.c.l.b16 %v383
        %v843 = vunpack.c.h.b16 %v383
        %v844 = vunpack.c.l.b16 %v384
        %v845 = vunpack.c.h.b16 %v384
        %v846 = vunpack.c.l.b16 %v385
        %v847 = vunpack.c.h.b16 %v385
        %v848 = vunpack.c.l.b16 %v386
        %v849 = vunpack.c.h.b16 %v386
        %v850 = vunpack.c.l.b16 %v387
        %v851 = vunpack.c.h.b16 %v387
        %v852 = vunpack.c.l.b16 %v388
        %v853 = vunpack.c.h.b16 %v388
        %v854 = vunpack.c.l.b16 %v389
        %v855 = vunpack.c.h.b16 %v389
        %v856 = vunpack.c.l.b16 %v390
        %v857 = vunpack.c.h.b16 %v390
        %v858 = vunpack.c.l.b16 %v391
        %v859 = vunpack.c.h.b16 %v391
        %v860 = vunpack.c.l.b16 %v392
        %v861 = vunpack.c.h.b16 %v392
        %v862 = vunpack.c.l.b16 %v393
        %v863 = vunpack.c.h.b16 %v393
        %v864 = vunpack.c.l.b16 %v394
        %v865 = vunpack.c.h.b16 %v394
        %v866 = vunpack.c.l.b16 %v395
        %v867 = vunpack.c.h.b16 %v395
        %v868 = vunpack.c.l.b16 %v396
        %v869 = vunpack.c.h.b16 %v396
        %v870 = vunpack.c.l.b16 %v397
        %v871 = vunpack.c.h.b16 %v397
        %v872 = vunpack.c.l.b16 %v398
        %v873 = vunpack.c.h.b16 %v398
        %v874 = vunpack.c.l.b16 %v399
        %v875 = vunpack.c.h.b16 %v399
        %v876 = vunpack.c.l.b16 %v400
        %v877 = vunpack.c.h.b16 %v400
        %v878 = vunpack.c.l.b16 %v401
        %v879 = vunpack.c.h.b16 %v401
        %v880 = vunpack.c.l.b16 %v402
        %v881 = vunpack.c.h.b16 %v402
        %v882 = vunpack.c.l.b16 %v403
        %v883 = vunpack.c.h.b16 %v403
        %v884 = vpack.c.b16 %v822, %v820
        %v885 = vpack.c.b16 %v823, %v821
        %v886 = vpack.c.b16 %v826, %v824
        %v887 = vpack.c.b16 %v827, %v825
        %v888 = vpack.c.b16 %v830, %v828
        %v889 = vpack.c.b16 %v831, %v829
        %v890 = vpack.c.b16 %v834, %v832
        %v891 = vpack.c.b16 %v835, %v833
        %v892 = vpack.c.b16 %v838, %v836
        %v893 = vpack.c.b16 %v839, %v837
        %v894 = vpack.c.b16 %v842, %v840
        %v895 = vpack.c.b16 %v843, %v841
        %v896 = vpack.c.b16 %v846, %v844
        %v897 = vpack.c.b16 %v847, %v845
        %v898 = vpack.c.b16 %v850, %v848
        %v899 = vpack.c.b16 %v851, %v849
        %v900 = vpack.c.b16 %v854, %v852
        %v901 = vpack.c.b16 %v855, %v853
        %v902 = vpack.c.b16 %v858, %v856
        %v903 = vpack.c.b16 %v859, %v857
        %v904 = vpack.c.b16 %v862, %v860
        %v905 = vpack.c.b16 %v863, %v861
        %v906 = vpack.c.b16 %v866, %v864
        %v907 = vpack.c.b16 %v867, %v865
        %v908 = vpack.c.b16 %v870, %v868
        %v909 = vpack.c.b16 %v871, %v869
        %v910 = vpack.c.b16 %v874, %v872
        %v911 = vpack.c.b16 %v875, %v873
        %v912 = vpack.c.b16 %v878, %v876
        %v913 = vpack.c.b16 %v879, %v877
        %v914 = vpack.c.b16 %v882, %v880
        %v915 = vpack.c.b16 %v883, %v881
        %948 = vmatprep.subr.bf16.mxu0 %v899
        %949 = vmatpush1.bf16.msra.mxu0 %v898
        %950 = vmatprep.subr.bf16.mxu0 %v897
        %951 = vmatpush1.bf16.msra.mxu0 %v896
        %952 = vmatprep.subr.bf16.mxu0 %v895
        %953 = vmatpush1.bf16.msra.mxu0 %v894
        %954 = vmatprep.subr.bf16.mxu0 %v893
        %955 = vmatpush1.bf16.msra.mxu0 %v892
        %956 = vmatprep.subr.bf16.mxu0 %v891
        %957 = vmatpush1.bf16.msra.mxu0 %v890
        %958 = vmatprep.subr.bf16.mxu0 %v889
        %959 = vmatpush1.bf16.msra.mxu0 %v888
        %960 = vmatprep.subr.bf16.mxu0 %v887
        %961 = vmatpush1.bf16.msra.mxu0 %v886
        %962 = vmatprep.subr.bf16.mxu0 %v885
        %963 = vmatpush1.bf16.msra.mxu0 %v884
        %964 = vmatprep.subr.bf16.mxu0 %v915
        %965 = vmatpush2.bf16.msra.mxu0 %v914
        %966 = vmatprep.subr.bf16.mxu0 %v913
        %967 = vmatpush2.bf16.msra.mxu0 %v912
        %968 = vmatprep.subr.bf16.mxu0 %v911
        %969 = vmatpush2.bf16.msra.mxu0 %v910
        %970 = vmatprep.subr.bf16.mxu0 %v909
        %971 = vmatpush2.bf16.msra.mxu0 %v908
        %972 = vmatprep.subr.bf16.mxu0 %v907
        %973 = vmatpush2.bf16.msra.mxu0 %v906
        %974 = vmatprep.subr.bf16.mxu0 %v905
        %975 = vmatpush2.bf16.msra.mxu0 %v904
        %976 = vmatprep.subr.bf16.mxu0 %v903
        %977 = vmatpush2.bf16.msra.mxu0 %v902
        %978 = vmatprep.subr.bf16.mxu0 %v901
        %979 = vmatpush2.bf16.msra.mxu0 %v900
        %980 = vmatprep.mubr.bf16.mxu0 %v725
        %981 = vmatmul.mubr.bf16.gmra.mxu0 %v724
        %v982 = vpop.f32.mrf.mxu0
        %v983 = vadd.f32 %v471, %v982
        %v984 = vpop.f32.mrf.mxu0
        %v985 = vadd.f32 %v471, %v984
        %v986 = vpop.f32.mrf.mxu0
        %v987 = vadd.f32 %v476, %v986
        %v988 = vpop.f32.mrf.mxu0
        %v989 = vadd.f32 %v476, %v988
        %990 = vmatprep.mubr.bf16.mxu0 %v727
        %991 = vmatmul.mubr.bf16.gmra.mxu0 %v726
        %v992 = vpop.f32.mrf.mxu0
        %v993 = vadd.f32 %v481, %v992
        %v994 = vpop.f32.mrf.mxu0
        %v995 = vadd.f32 %v481, %v994
        %v996 = vpop.f32.mrf.mxu0
        %v997 = vadd.f32 %v486, %v996
        %v998 = vpop.f32.mrf.mxu0
        %v999 = vadd.f32 %v486, %v998
        %1000 = vmatprep.mubr.bf16.mxu0 %v729
        %1001 = vmatmul.mubr.bf16.gmra.mxu0 %v728
        %v1002 = vpop.f32.mrf.mxu0
        %v1003 = vadd.f32 %v491, %v1002
        %v1004 = vpop.f32.mrf.mxu0
        %v1005 = vadd.f32 %v491, %v1004
        %v1006 = vpop.f32.mrf.mxu0
        %v1007 = vadd.f32 %v496, %v1006
        %v1008 = vpop.f32.mrf.mxu0
        %v1009 = vadd.f32 %v496, %v1008
        %1010 = vmatprep.mubr.bf16.mxu0 %v731
        %1011 = vmatmul.mubr.bf16.gmra.mxu0 %v730
        %v1012 = vpop.f32.mrf.mxu0
        %v1013 = vadd.f32 %v501, %v1012
        %v1014 = vpop.f32.mrf.mxu0
        %v1015 = vadd.f32 %v501, %v1014
        %v1016 = vpop.f32.mrf.mxu0
        %v1017 = vadd.f32 %v506, %v1016
        %v1018 = vpop.f32.mrf.mxu0
        %v1019 = vadd.f32 %v506, %v1018
        %1020 = vmatprep.mubr.bf16.mxu0 %v733
        %1021 = vmatmul.mubr.bf16.gmra.mxu0 %v732
        %v1022 = vpop.f32.mrf.mxu0
        %v1023 = vadd.f32 %v511, %v1022
        %v1024 = vpop.f32.mrf.mxu0
        %v1025 = vadd.f32 %v511, %v1024
        %v1026 = vpop.f32.mrf.mxu0
        %v1027 = vadd.f32 %v516, %v1026
        %v1028 = vpop.f32.mrf.mxu0
        %v1029 = vadd.f32 %v516, %v1028
        %1030 = vmatprep.mubr.bf16.mxu0 %v735
        %1031 = vmatmul.mubr.bf16.gmra.mxu0 %v734
        %v1032 = vpop.f32.mrf.mxu0
        %v1033 = vadd.f32 %v521, %v1032
        %v1034 = vpop.f32.mrf.mxu0
        %v1035 = vadd.f32 %v521, %v1034
        %v1036 = vpop.f32.mrf.mxu0
        %v1037 = vadd.f32 %v526, %v1036
        %v1038 = vpop.f32.mrf.mxu0
        %v1039 = vadd.f32 %v526, %v1038
        %1040 = vmatprep.mubr.bf16.mxu0 %v737
        %1041 = vmatmul.mubr.bf16.gmra.mxu0 %v736
        %v1042 = vpop.f32.mrf.mxu0
        %v1043 = vadd.f32 %v531, %v1042
        %v1044 = vpop.f32.mrf.mxu0
        %v1045 = vadd.f32 %v531, %v1044
        %v1046 = vpop.f32.mrf.mxu0
        %v1047 = vadd.f32 %v536, %v1046
        %v1048 = vpop.f32.mrf.mxu0
        %v1049 = vadd.f32 %v536, %v1048
        %1050 = vmatprep.mubr.bf16.mxu0 %v739
        %1051 = vmatmul.mubr.bf16.gmra.mxu0 %v738
        %v1052 = vpop.f32.mrf.mxu0
        %v1053 = vadd.f32 %v541, %v1052
        %v1054 = vpop.f32.mrf.mxu0
        %v1055 = vadd.f32 %v541, %v1054
        %v1056 = vpop.f32.mrf.mxu0
        %v1057 = vadd.f32 %v546, %v1056
        %v1058 = vpop.f32.mrf.mxu0
        %v1059 = vadd.f32 %v546, %v1058
        %1060 = vmatprep.mubr.bf16.mxu0 %v741
        %1061 = vmatmul.mubr.bf16.gmra.mxu0 %v740
        %v1062 = vpop.f32.mrf.mxu0
        %v1063 = vadd.f32 %v551, %v1062
        %v1064 = vpop.f32.mrf.mxu0
        %v1065 = vadd.f32 %v551, %v1064
        %v1066 = vpop.f32.mrf.mxu0
        %v1067 = vadd.f32 %v556, %v1066
        %v1068 = vpop.f32.mrf.mxu0
        %v1069 = vadd.f32 %v556, %v1068
        %1070 = vmatprep.mubr.bf16.mxu0 %v743
        %1071 = vmatmul.mubr.bf16.gmra.mxu0 %v742
        %v1072 = vpop.f32.mrf.mxu0
        %v1073 = vadd.f32 %v561, %v1072
        %v1074 = vpop.f32.mrf.mxu0
        %v1075 = vadd.f32 %v561, %v1074
        %v1076 = vpop.f32.mrf.mxu0
        %v1077 = vadd.f32 %v566, %v1076
        %v1078 = vpop.f32.mrf.mxu0
        %v1079 = vadd.f32 %v566, %v1078
        %1080 = vmatprep.mubr.bf16.mxu0 %v745
        %1081 = vmatmul.mubr.bf16.gmra.mxu0 %v744
        %v1082 = vpop.f32.mrf.mxu0
        %v1083 = vadd.f32 %v571, %v1082
        %v1084 = vpop.f32.mrf.mxu0
        %v1085 = vadd.f32 %v571, %v1084
        %v1086 = vpop.f32.mrf.mxu0
        %v1087 = vadd.f32 %v576, %v1086
        %v1088 = vpop.f32.mrf.mxu0
        %v1089 = vadd.f32 %v576, %v1088
        %1090 = vmatprep.mubr.bf16.mxu0 %v747
        %1091 = vmatmul.mubr.bf16.gmra.mxu0 %v746
        %v1092 = vpop.f32.mrf.mxu0
        %v1093 = vadd.f32 %v581, %v1092
        %v1094 = vpop.f32.mrf.mxu0
        %v1095 = vadd.f32 %v581, %v1094
        %v1096 = vpop.f32.mrf.mxu0
        %v1097 = vadd.f32 %v586, %v1096
        %v1098 = vpop.f32.mrf.mxu0
        %v1099 = vadd.f32 %v586, %v1098
        %1100 = vmatprep.mubr.bf16.mxu0 %v749
        %1101 = vmatmul.mubr.bf16.gmra.mxu0 %v748
        %v1102 = vpop.f32.mrf.mxu0
        %v1103 = vadd.f32 %v591, %v1102
        %v1104 = vpop.f32.mrf.mxu0
        %v1105 = vadd.f32 %v591, %v1104
        %v1106 = vpop.f32.mrf.mxu0
        %v1107 = vadd.f32 %v596, %v1106
        %v1108 = vpop.f32.mrf.mxu0
        %v1109 = vadd.f32 %v596, %v1108
        %1110 = vmatprep.mubr.bf16.mxu0 %v751
        %1111 = vmatmul.mubr.bf16.gmra.mxu0 %v750
        %v1112 = vpop.f32.mrf.mxu0
        %v1113 = vadd.f32 %v601, %v1112
        %v1114 = vpop.f32.mrf.mxu0
        %v1115 = vadd.f32 %v601, %v1114
        %v1116 = vpop.f32.mrf.mxu0
        %v1117 = vadd.f32 %v606, %v1116
        %v1118 = vpop.f32.mrf.mxu0
        %v1119 = vadd.f32 %v606, %v1118
        %1120 = vmatprep.mubr.bf16.mxu0 %v753
        %1121 = vmatmul.mubr.bf16.gmra.mxu0 %v752
        %v1122 = vpop.f32.mrf.mxu0
        %v1123 = vadd.f32 %v611, %v1122
        %v1124 = vpop.f32.mrf.mxu0
        %v1125 = vadd.f32 %v611, %v1124
        %v1126 = vpop.f32.mrf.mxu0
        %v1127 = vadd.f32 %v616, %v1126
        %v1128 = vpop.f32.mrf.mxu0
        %v1129 = vadd.f32 %v616, %v1128
        %1130 = vmatprep.mubr.bf16.mxu0 %v755
        %1131 = vmatmul.mubr.bf16.gmra.mxu0 %v754
        %v1132 = vpop.f32.mrf.mxu0
        %v1133 = vadd.f32 %v621, %v1132
        %v1134 = vpop.f32.mrf.mxu0
        %v1135 = vadd.f32 %v621, %v1134
        %v1136 = vpop.f32.mrf.mxu0
        %v1137 = vadd.f32 %v626, %v1136
        %v1138 = vpop.f32.mrf.mxu0
        %v1139 = vadd.f32 %v626, %v1138
        %1140 = vdwg.mxu0
        %v1141 = vmax.f32 %v983, 0.0
        %v1142 = vmax.f32 %v985, 0.0
        %v1143 = vmax.f32 %v987, 0.0
        %v1144 = vmax.f32 %v989, 0.0
        %v1145 = vmax.f32 %v993, 0.0
        %v1146 = vmax.f32 %v995, 0.0
        %v1147 = vmax.f32 %v997, 0.0
        %v1148 = vmax.f32 %v999, 0.0
        %v1149 = vmax.f32 %v1003, 0.0
        %v1150 = vmax.f32 %v1005, 0.0
        %v1151 = vmax.f32 %v1007, 0.0
        %v1152 = vmax.f32 %v1009, 0.0
        %v1153 = vmax.f32 %v1013, 0.0
        %v1154 = vmax.f32 %v1015, 0.0
        %v1155 = vmax.f32 %v1017, 0.0
        %v1156 = vmax.f32 %v1019, 0.0
        %v1157 = vmax.f32 %v1023, 0.0
        %v1158 = vmax.f32 %v1025, 0.0
        %v1159 = vmax.f32 %v1027, 0.0
        %v1160 = vmax.f32 %v1029, 0.0
        %v1161 = vmax.f32 %v1033, 0.0
        %v1162 = vmax.f32 %v1035, 0.0
        %v1163 = vmax.f32 %v1037, 0.0
        %v1164 = vmax.f32 %v1039, 0.0
        %v1165 = vmax.f32 %v1043, 0.0
        %v1166 = vmax.f32 %v1045, 0.0
        %v1167 = vmax.f32 %v1047, 0.0
        %v1168 = vmax.f32 %v1049, 0.0
        %v1169 = vmax.f32 %v1053, 0.0
        %v1170 = vmax.f32 %v1055, 0.0
        %v1171 = vmax.f32 %v1057, 0.0
        %v1172 = vmax.f32 %v1059, 0.0
        %v1173 = vmax.f32 %v1063, 0.0
        %v1174 = vmax.f32 %v1065, 0.0
        %v1175 = vmax.f32 %v1067, 0.0
        %v1176 = vmax.f32 %v1069, 0.0
        %v1177 = vmax.f32 %v1073, 0.0
        %v1178 = vmax.f32 %v1075, 0.0
        %v1179 = vmax.f32 %v1077, 0.0
        %v1180 = vmax.f32 %v1079, 0.0
        %v1181 = vmax.f32 %v1083, 0.0
        %v1182 = vmax.f32 %v1085, 0.0
        %v1183 = vmax.f32 %v1087, 0.0
        %v1184 = vmax.f32 %v1089, 0.0
        %v1185 = vmax.f32 %v1093, 0.0
        %v1186 = vmax.f32 %v1095, 0.0
        %v1187 = vmax.f32 %v1097, 0.0
        %v1188 = vmax.f32 %v1099, 0.0
        %v1189 = vmax.f32 %v1103, 0.0
        %v1190 = vmax.f32 %v1105, 0.0
        %v1191 = vmax.f32 %v1107, 0.0
        %v1192 = vmax.f32 %v1109, 0.0
        %v1193 = vmax.f32 %v1113, 0.0
        %v1194 = vmax.f32 %v1115, 0.0
        %v1195 = vmax.f32 %v1117, 0.0
        %v1196 = vmax.f32 %v1119, 0.0
        %v1197 = vmax.f32 %v1123, 0.0
        %v1198 = vmax.f32 %v1125, 0.0
        %v1199 = vmax.f32 %v1127, 0.0
        %v1200 = vmax.f32 %v1129, 0.0
        %v1201 = vmax.f32 %v1133, 0.0
        %v1202 = vmax.f32 %v1135, 0.0
        %v1203 = vmax.f32 %v1137, 0.0
        %v1204 = vmax.f32 %v1139, 0.0
        %v1205 = vpack.c.bf16 %v1143, %v1141
        %v1206 = vpack.c.bf16 %v1144, %v1142
        %v1207 = vpack.c.bf16 %v1147, %v1145
        %v1208 = vpack.c.bf16 %v1148, %v1146
        %v1209 = vpack.c.bf16 %v1151, %v1149
        %v1210 = vpack.c.bf16 %v1152, %v1150
        %v1211 = vpack.c.bf16 %v1155, %v1153
        %v1212 = vpack.c.bf16 %v1156, %v1154
        %v1213 = vpack.c.bf16 %v1159, %v1157
        %v1214 = vpack.c.bf16 %v1160, %v1158
        %v1215 = vpack.c.bf16 %v1163, %v1161
        %v1216 = vpack.c.bf16 %v1164, %v1162
        %v1217 = vpack.c.bf16 %v1167, %v1165
        %v1218 = vpack.c.bf16 %v1168, %v1166
        %v1219 = vpack.c.bf16 %v1171, %v1169
        %v1220 = vpack.c.bf16 %v1172, %v1170
        %v1221 = vpack.c.bf16 %v1175, %v1173
        %v1222 = vpack.c.bf16 %v1176, %v1174
        %v1223 = vpack.c.bf16 %v1179, %v1177
        %v1224 = vpack.c.bf16 %v1180, %v1178
        %v1225 = vpack.c.bf16 %v1183, %v1181
        %v1226 = vpack.c.bf16 %v1184, %v1182
        %v1227 = vpack.c.bf16 %v1187, %v1185
        %v1228 = vpack.c.bf16 %v1188, %v1186
        %v1229 = vpack.c.bf16 %v1191, %v1189
        %v1230 = vpack.c.bf16 %v1192, %v1190
        %v1231 = vpack.c.bf16 %v1195, %v1193
        %v1232 = vpack.c.bf16 %v1196, %v1194
        %v1233 = vpack.c.bf16 %v1199, %v1197
        %v1234 = vpack.c.bf16 %v1200, %v1198
        %v1235 = vpack.c.bf16 %v1203, %v1201
        %v1236 = vpack.c.bf16 %v1204, %v1202
        %v1237 = vld [vmem:[%s3] sm:$0xff]
        %v1238 = vld [vmem:[%s3 + $0x8] sm:$0xff]
        %v1239 = vld [vmem:[%s3 + $0x10] sm:$0xff]
        %v1240 = vld [vmem:[%s3 + $0x18] sm:$0xff]
        %v1241 = vld [vmem:[%s3 + $0x20] sm:$0xff]
        %v1242 = vld [vmem:[%s3 + $0x28] sm:$0xff]
        %v1243 = vld [vmem:[%s3 + $0x30] sm:$0xff]
        %v1244 = vld [vmem:[%s3 + $0x38] sm:$0xff]
        %v1245 = vld [vmem:[%s3 + $0x40] sm:$0xff]
        %v1246 = vld [vmem:[%s3 + $0x48] sm:$0xff]
        %v1247 = vld [vmem:[%s3 + $0x50] sm:$0xff]
        %v1248 = vld [vmem:[%s3 + $0x58] sm:$0xff]
        %v1249 = vld [vmem:[%s3 + $0x60] sm:$0xff]
        %v1250 = vld [vmem:[%s3 + $0x68] sm:$0xff]
        %v1251 = vld [vmem:[%s3 + $0x70] sm:$0xff]
        %v1252 = vld [vmem:[%s3 + $0x78] sm:$0xff]
        %v1253 = vld [vmem:[%s4] sm:$0xff]
        %v1254 = vld [vmem:[%s4 + $0x8] sm:$0xff]
        %v1255 = vld [vmem:[%s4 + $0x10] sm:$0xff]
        %v1256 = vld [vmem:[%s4 + $0x18] sm:$0xff]
        %v1257 = vld [vmem:[%s4 + $0x20] sm:$0xff]
        %v1258 = vld [vmem:[%s4 + $0x28] sm:$0xff]
        %v1259 = vld [vmem:[%s4 + $0x30] sm:$0xff]
        %v1260 = vld [vmem:[%s4 + $0x38] sm:$0xff]
        %v1261 = vld [vmem:[%s4 + $0x40] sm:$0xff]
        %v1262 = vld [vmem:[%s4 + $0x48] sm:$0xff]
        %v1263 = vld [vmem:[%s4 + $0x50] sm:$0xff]
        %v1264 = vld [vmem:[%s4 + $0x58] sm:$0xff]
        %v1265 = vld [vmem:[%s4 + $0x60] sm:$0xff]
        %v1266 = vld [vmem:[%s4 + $0x68] sm:$0xff]
        %v1267 = vld [vmem:[%s4 + $0x70] sm:$0xff]
        %v1268 = vld [vmem:[%s4 + $0x78] sm:$0xff]
        %1270 = vset.pattern.permute.xlu0 0
        %1271 = vperm.xlu0 %1270, %v1253
        %v1272 = vpop.permute.xlu0 %1271
        %1275 = vset.pattern.permute.xlu0 0
        %1276 = vperm.xlu0 %1275, %v1254
        %v1277 = vpop.permute.xlu0 %1276
        %1280 = vset.pattern.permute.xlu0 0
        %1281 = vperm.xlu0 %1280, %v1255
        %v1282 = vpop.permute.xlu0 %1281
        %1285 = vset.pattern.permute.xlu0 0
        %1286 = vperm.xlu0 %1285, %v1256
        %v1287 = vpop.permute.xlu0 %1286
        %1290 = vset.pattern.permute.xlu0 0
        %1291 = vperm.xlu0 %1290, %v1257
        %v1292 = vpop.permute.xlu0 %1291
        %1295 = vset.pattern.permute.xlu0 0
        %1296 = vperm.xlu0 %1295, %v1258
        %v1297 = vpop.permute.xlu0 %1296
        %1300 = vset.pattern.permute.xlu0 0
        %1301 = vperm.xlu0 %1300, %v1259
        %v1302 = vpop.permute.xlu0 %1301
        %1305 = vset.pattern.permute.xlu0 0
        %1306 = vperm.xlu0 %1305, %v1260
        %v1307 = vpop.permute.xlu0 %1306
        %1310 = vset.pattern.permute.xlu0 0
        %1311 = vperm.xlu0 %1310, %v1261
        %v1312 = vpop.permute.xlu0 %1311
        %1315 = vset.pattern.permute.xlu0 0
        %1316 = vperm.xlu0 %1315, %v1262
        %v1317 = vpop.permute.xlu0 %1316
        %1320 = vset.pattern.permute.xlu0 0
        %1321 = vperm.xlu0 %1320, %v1263
        %v1322 = vpop.permute.xlu0 %1321
        %1325 = vset.pattern.permute.xlu0 0
        %1326 = vperm.xlu0 %1325, %v1264
        %v1327 = vpop.permute.xlu0 %1326
        %1330 = vset.pattern.permute.xlu0 0
        %1331 = vperm.xlu0 %1330, %v1265
        %v1332 = vpop.permute.xlu0 %1331
        %1335 = vset.pattern.permute.xlu0 0
        %1336 = vperm.xlu0 %1335, %v1266
        %v1337 = vpop.permute.xlu0 %1336
        %1340 = vset.pattern.permute.xlu0 0
        %1341 = vperm.xlu0 %1340, %v1267
        %v1342 = vpop.permute.xlu0 %1341
        %1345 = vset.pattern.permute.xlu0 0
        %1346 = vperm.xlu0 %1345, %v1268
        %v1347 = vpop.permute.xlu0 %1346
        %v1365 = vunpack.c.l.b16 %v1237
        %v1366 = vunpack.c.h.b16 %v1237
        %v1367 = vunpack.c.l.b16 %v1238
        %v1368 = vunpack.c.h.b16 %v1238
        %v1369 = vunpack.c.l.b16 %v1239
        %v1370 = vunpack.c.h.b16 %v1239
        %v1371 = vunpack.c.l.b16 %v1240
        %v1372 = vunpack.c.h.b16 %v1240
        %v1373 = vunpack.c.l.b16 %v1241
        %v1374 = vunpack.c.h.b16 %v1241
        %v1375 = vunpack.c.l.b16 %v1242
        %v1376 = vunpack.c.h.b16 %v1242
        %v1377 = vunpack.c.l.b16 %v1243
        %v1378 = vunpack.c.h.b16 %v1243
        %v1379 = vunpack.c.l.b16 %v1244
        %v1380 = vunpack.c.h.b16 %v1244
        %v1381 = vunpack.c.l.b16 %v1245
        %v1382 = vunpack.c.h.b16 %v1245
        %v1383 = vunpack.c.l.b16 %v1246
        %v1384 = vunpack.c.h.b16 %v1246
        %v1385 = vunpack.c.l.b16 %v1247
        %v1386 = vunpack.c.h.b16 %v1247
        %v1387 = vunpack.c.l.b16 %v1248
        %v1388 = vunpack.c.h.b16 %v1248
        %v1389 = vunpack.c.l.b16 %v1249
        %v1390 = vunpack.c.h.b16 %v1249
        %v1391 = vunpack.c.l.b16 %v1250
        %v1392 = vunpack.c.h.b16 %v1250
        %v1393 = vunpack.c.l.b16 %v1251
        %v1394 = vunpack.c.h.b16 %v1251
        %v1395 = vunpack.c.l.b16 %v1252
        %v1396 = vunpack.c.h.b16 %v1252
        %v1397 = vpack.c.b16 %v1367, %v1365
        %v1398 = vpack.c.b16 %v1368, %v1366
        %v1399 = vpack.c.b16 %v1371, %v1369
        %v1400 = vpack.c.b16 %v1372, %v1370
        %v1401 = vpack.c.b16 %v1375, %v1373
        %v1402 = vpack.c.b16 %v1376, %v1374
        %v1403 = vpack.c.b16 %v1379, %v1377
        %v1404 = vpack.c.b16 %v1380, %v1378
        %v1405 = vpack.c.b16 %v1383, %v1381
        %v1406 = vpack.c.b16 %v1384, %v1382
        %v1407 = vpack.c.b16 %v1387, %v1385
        %v1408 = vpack.c.b16 %v1388, %v1386
        %v1409 = vpack.c.b16 %v1391, %v1389
        %v1410 = vpack.c.b16 %v1392, %v1390
        %v1411 = vpack.c.b16 %v1395, %v1393
        %v1412 = vpack.c.b16 %v1396, %v1394
        %1429 = vmatprep.subr.bf16.mxu0 %v1220
        %1430 = vmatpush1.bf16.msra.mxu0 %v1219
        %1431 = vmatprep.subr.bf16.mxu0 %v1218
        %1432 = vmatpush1.bf16.msra.mxu0 %v1217
        %1433 = vmatprep.subr.bf16.mxu0 %v1216
        %1434 = vmatpush1.bf16.msra.mxu0 %v1215
        %1435 = vmatprep.subr.bf16.mxu0 %v1214
        %1436 = vmatpush1.bf16.msra.mxu0 %v1213
        %1437 = vmatprep.subr.bf16.mxu0 %v1212
        %1438 = vmatpush1.bf16.msra.mxu0 %v1211
        %1439 = vmatprep.subr.bf16.mxu0 %v1210
        %1440 = vmatpush1.bf16.msra.mxu0 %v1209
        %1441 = vmatprep.subr.bf16.mxu0 %v1208
        %1442 = vmatpush1.bf16.msra.mxu0 %v1207
        %1443 = vmatprep.subr.bf16.mxu0 %v1206
        %1444 = vmatpush1.bf16.msra.mxu0 %v1205
        %1445 = vmatprep.subr.bf16.mxu0 %v1236
        %1446 = vmatpush2.bf16.msra.mxu0 %v1235
        %1447 = vmatprep.subr.bf16.mxu0 %v1234
        %1448 = vmatpush2.bf16.msra.mxu0 %v1233
        %1449 = vmatprep.subr.bf16.mxu0 %v1232
        %1450 = vmatpush2.bf16.msra.mxu0 %v1231
        %1451 = vmatprep.subr.bf16.mxu0 %v1230
        %1452 = vmatpush2.bf16.msra.mxu0 %v1229
        %1453 = vmatprep.subr.bf16.mxu0 %v1228
        %1454 = vmatpush2.bf16.msra.mxu0 %v1227
        %1455 = vmatprep.subr.bf16.mxu0 %v1226
        %1456 = vmatpush2.bf16.msra.mxu0 %v1225
        %1457 = vmatprep.subr.bf16.mxu0 %v1224
        %1458 = vmatpush2.bf16.msra.mxu0 %v1223
        %1459 = vmatprep.subr.bf16.mxu0 %v1222
        %1460 = vmatpush2.bf16.msra.mxu0 %v1221
        %1461 = vmatprep.mubr.bf16.mxu0 %v1398
        %1462 = vmatmul.mubr.bf16.gmra.mxu0 %v1397
        %v1463 = vpop.f32.mrf.mxu0
        %v1464 = vadd.f32 %v1272, %v1463
        %v1465 = vpop.f32.mrf.mxu0
        %v1466 = vadd.f32 %v1272, %v1465
        %v1467 = vpop.f32.mrf.mxu0
        %v1468 = vadd.f32 %v1277, %v1467
        %v1469 = vpop.f32.mrf.mxu0
        %v1470 = vadd.f32 %v1277, %v1469
        %1471 = vmatprep.mubr.bf16.mxu0 %v1400
        %1472 = vmatmul.mubr.bf16.gmra.mxu0 %v1399
        %v1473 = vpop.f32.mrf.mxu0
        %v1474 = vadd.f32 %v1282, %v1473
        %v1475 = vpop.f32.mrf.mxu0
        %v1476 = vadd.f32 %v1282, %v1475
        %v1477 = vpop.f32.mrf.mxu0
        %v1478 = vadd.f32 %v1287, %v1477
        %v1479 = vpop.f32.mrf.mxu0
        %v1480 = vadd.f32 %v1287, %v1479
        %1481 = vmatprep.mubr.bf16.mxu0 %v1402
        %1482 = vmatmul.mubr.bf16.gmra.mxu0 %v1401
        %v1483 = vpop.f32.mrf.mxu0
        %v1484 = vadd.f32 %v1292, %v1483
        %v1485 = vpop.f32.mrf.mxu0
        %v1486 = vadd.f32 %v1292, %v1485
        %v1487 = vpop.f32.mrf.mxu0
        %v1488 = vadd.f32 %v1297, %v1487
        %v1489 = vpop.f32.mrf.mxu0
        %v1490 = vadd.f32 %v1297, %v1489
        %1491 = vmatprep.mubr.bf16.mxu0 %v1404
        %1492 = vmatmul.mubr.bf16.gmra.mxu0 %v1403
        %v1493 = vpop.f32.mrf.mxu0
        %v1494 = vadd.f32 %v1302, %v1493
        %v1495 = vpop.f32.mrf.mxu0
        %v1496 = vadd.f32 %v1302, %v1495
        %v1497 = vpop.f32.mrf.mxu0
        %v1498 = vadd.f32 %v1307, %v1497
        %v1499 = vpop.f32.mrf.mxu0
        %v1500 = vadd.f32 %v1307, %v1499
        %1501 = vmatprep.mubr.bf16.mxu0 %v1406
        %1502 = vmatmul.mubr.bf16.gmra.mxu0 %v1405
        %v1503 = vpop.f32.mrf.mxu0
        %v1504 = vadd.f32 %v1312, %v1503
        %v1505 = vpop.f32.mrf.mxu0
        %v1506 = vadd.f32 %v1312, %v1505
        %v1507 = vpop.f32.mrf.mxu0
        %v1508 = vadd.f32 %v1317, %v1507
        %v1509 = vpop.f32.mrf.mxu0
        %v1510 = vadd.f32 %v1317, %v1509
        %1511 = vmatprep.mubr.bf16.mxu0 %v1408
        %1512 = vmatmul.mubr.bf16.gmra.mxu0 %v1407
        %v1513 = vpop.f32.mrf.mxu0
        %v1514 = vadd.f32 %v1322, %v1513
        %v1515 = vpop.f32.mrf.mxu0
        %v1516 = vadd.f32 %v1322, %v1515
        %v1517 = vpop.f32.mrf.mxu0
        %v1518 = vadd.f32 %v1327, %v1517
        %v1519 = vpop.f32.mrf.mxu0
        %v1520 = vadd.f32 %v1327, %v1519
        %1521 = vmatprep.mubr.bf16.mxu0 %v1410
        %1522 = vmatmul.mubr.bf16.gmra.mxu0 %v1409
        %v1523 = vpop.f32.mrf.mxu0
        %v1524 = vadd.f32 %v1332, %v1523
        %v1525 = vpop.f32.mrf.mxu0
        %v1526 = vadd.f32 %v1332, %v1525
        %v1527 = vpop.f32.mrf.mxu0
        %v1528 = vadd.f32 %v1337, %v1527
        %v1529 = vpop.f32.mrf.mxu0
        %v1530 = vadd.f32 %v1337, %v1529
        %1531 = vmatprep.mubr.bf16.mxu0 %v1412
        %1532 = vmatmul.mubr.bf16.gmra.mxu0 %v1411
        %v1533 = vpop.f32.mrf.mxu0
        %v1534 = vadd.f32 %v1342, %v1533
        %v1535 = vpop.f32.mrf.mxu0
        %v1536 = vadd.f32 %v1342, %v1535
        %v1537 = vpop.f32.mrf.mxu0
        %v1538 = vadd.f32 %v1347, %v1537
        %v1539 = vpop.f32.mrf.mxu0
        %v1540 = vadd.f32 %v1347, %v1539
        %1541 = vdwg.mxu0
        %v1542 = vmax.f32 %v1464, 0.0
        %v1543 = vmax.f32 %v1466, 0.0
        %v1544 = vmax.f32 %v1468, 0.0
        %v1545 = vmax.f32 %v1470, 0.0
        %v1546 = vmax.f32 %v1474, 0.0
        %v1547 = vmax.f32 %v1476, 0.0
        %v1548 = vmax.f32 %v1478, 0.0
        %v1549 = vmax.f32 %v1480, 0.0
        %v1550 = vmax.f32 %v1484, 0.0
        %v1551 = vmax.f32 %v1486, 0.0
        %v1552 = vmax.f32 %v1488, 0.0
        %v1553 = vmax.f32 %v1490, 0.0
        %v1554 = vmax.f32 %v1494, 0.0
        %v1555 = vmax.f32 %v1496, 0.0
        %v1556 = vmax.f32 %v1498, 0.0
        %v1557 = vmax.f32 %v1500, 0.0
        %v1558 = vmax.f32 %v1504, 0.0
        %v1559 = vmax.f32 %v1506, 0.0
        %v1560 = vmax.f32 %v1508, 0.0
        %v1561 = vmax.f32 %v1510, 0.0
        %v1562 = vmax.f32 %v1514, 0.0
        %v1563 = vmax.f32 %v1516, 0.0
        %v1564 = vmax.f32 %v1518, 0.0
        %v1565 = vmax.f32 %v1520, 0.0
        %v1566 = vmax.f32 %v1524, 0.0
        %v1567 = vmax.f32 %v1526, 0.0
        %v1568 = vmax.f32 %v1528, 0.0
        %v1569 = vmax.f32 %v1530, 0.0
        %v1570 = vmax.f32 %v1534, 0.0
        %v1571 = vmax.f32 %v1536, 0.0
        %v1572 = vmax.f32 %v1538, 0.0
        %v1573 = vmax.f32 %v1540, 0.0
        %v1574 = vpack.c.bf16 %v1544, %v1542
        %v1575 = vpack.c.bf16 %v1545, %v1543
        %v1576 = vpack.c.bf16 %v1548, %v1546
        %v1577 = vpack.c.bf16 %v1549, %v1547
        %v1578 = vpack.c.bf16 %v1552, %v1550
        %v1579 = vpack.c.bf16 %v1553, %v1551
        %v1580 = vpack.c.bf16 %v1556, %v1554
        %v1581 = vpack.c.bf16 %v1557, %v1555
        %v1582 = vpack.c.bf16 %v1560, %v1558
        %v1583 = vpack.c.bf16 %v1561, %v1559
        %v1584 = vpack.c.bf16 %v1564, %v1562
        %v1585 = vpack.c.bf16 %v1565, %v1563
        %v1586 = vpack.c.bf16 %v1568, %v1566
        %v1587 = vpack.c.bf16 %v1569, %v1567
        %v1588 = vpack.c.bf16 %v1572, %v1570
        %v1589 = vpack.c.bf16 %v1573, %v1571
        %v1590 = vld [vmem:[%s5] sm:$0xf]
        %v1591 = vld [vmem:[%s5 + $0x4] sm:$0xf]
        %v1592 = vld [vmem:[%s5 + $0x8] sm:$0xf]
        %v1593 = vld [vmem:[%s5 + $0xc] sm:$0xf]
        %v1594 = vld [vmem:[%s5 + $0x10] sm:$0xf]
        %v1595 = vld [vmem:[%s5 + $0x14] sm:$0xf]
        %v1596 = vld [vmem:[%s5 + $0x18] sm:$0xf]
        %v1597 = vld [vmem:[%s5 + $0x1c] sm:$0xf]
        %v1598 = vld [vmem:[%s5 + $0x20] sm:$0xf]
        %v1599 = vld [vmem:[%s5 + $0x24] sm:$0xf]
        %v1600 = vld [vmem:[%s5 + $0x28] sm:$0xf]
        %v1601 = vld [vmem:[%s5 + $0x2c] sm:$0xf]
        %v1602 = vld [vmem:[%s5 + $0x30] sm:$0xf]
        %v1603 = vld [vmem:[%s5 + $0x34] sm:$0xf]
        %v1604 = vld [vmem:[%s5 + $0x38] sm:$0xf]
        %v1605 = vld [vmem:[%s5 + $0x3c] sm:$0xf]
        %v1606 = vld [vmem:[%s6] sm:$0xff]
        %v1607 = vld [vmem:[%s6 + $0x8] sm:$0xff]
        %v1608 = vld [vmem:[%s6 + $0x10] sm:$0xff]
        %v1609 = vld [vmem:[%s6 + $0x18] sm:$0xff]
        %v1610 = vld [vmem:[%s6 + $0x20] sm:$0xff]
        %v1611 = vld [vmem:[%s6 + $0x28] sm:$0xff]
        %v1612 = vld [vmem:[%s6 + $0x30] sm:$0xff]
        %v1613 = vld [vmem:[%s6 + $0x38] sm:$0xff]
        %v1614 = vld [vmem:[%s6 + $0x40] sm:$0xff]
        %v1615 = vld [vmem:[%s6 + $0x48] sm:$0xff]
        %v1616 = vld [vmem:[%s6 + $0x50] sm:$0xff]
        %v1617 = vld [vmem:[%s6 + $0x58] sm:$0xff]
        %v1618 = vld [vmem:[%s6 + $0x60] sm:$0xff]
        %v1619 = vld [vmem:[%s6 + $0x68] sm:$0xff]
        %v1620 = vld [vmem:[%s6 + $0x70] sm:$0xff]
        %v1621 = vld [vmem:[%s6 + $0x78] sm:$0xff]
        %1623 = vset.pattern.permute.xlu0 0
        %1624 = vperm.xlu0 %1623, %v1606
        %v1625 = vpop.permute.xlu0 %1624
        %1628 = vset.pattern.permute.xlu0 0
        %1629 = vperm.xlu0 %1628, %v1607
        %v1630 = vpop.permute.xlu0 %1629
        %1633 = vset.pattern.permute.xlu0 0
        %1634 = vperm.xlu0 %1633, %v1608
        %v1635 = vpop.permute.xlu0 %1634
        %1638 = vset.pattern.permute.xlu0 0
        %1639 = vperm.xlu0 %1638, %v1609
        %v1640 = vpop.permute.xlu0 %1639
        %1643 = vset.pattern.permute.xlu0 0
        %1644 = vperm.xlu0 %1643, %v1610
        %v1645 = vpop.permute.xlu0 %1644
        %1648 = vset.pattern.permute.xlu0 0
        %1649 = vperm.xlu0 %1648, %v1611
        %v1650 = vpop.permute.xlu0 %1649
        %1653 = vset.pattern.permute.xlu0 0
        %1654 = vperm.xlu0 %1653, %v1612
        %v1655 = vpop.permute.xlu0 %1654
        %1658 = vset.pattern.permute.xlu0 0
        %1659 = vperm.xlu0 %1658, %v1613
        %v1660 = vpop.permute.xlu0 %1659
        %1663 = vset.pattern.permute.xlu0 0
        %1664 = vperm.xlu0 %1663, %v1614
        %v1665 = vpop.permute.xlu0 %1664
        %1668 = vset.pattern.permute.xlu0 0
        %1669 = vperm.xlu0 %1668, %v1615
        %v1670 = vpop.permute.xlu0 %1669
        %1673 = vset.pattern.permute.xlu0 0
        %1674 = vperm.xlu0 %1673, %v1616
        %v1675 = vpop.permute.xlu0 %1674
        %1678 = vset.pattern.permute.xlu0 0
        %1679 = vperm.xlu0 %1678, %v1617
        %v1680 = vpop.permute.xlu0 %1679
        %1683 = vset.pattern.permute.xlu0 0
        %1684 = vperm.xlu0 %1683, %v1618
        %v1685 = vpop.permute.xlu0 %1684
        %1688 = vset.pattern.permute.xlu0 0
        %1689 = vperm.xlu0 %1688, %v1619
        %v1690 = vpop.permute.xlu0 %1689
        %1693 = vset.pattern.permute.xlu0 0
        %1694 = vperm.xlu0 %1693, %v1620
        %v1695 = vpop.permute.xlu0 %1694
        %1698 = vset.pattern.permute.xlu0 0
        %1699 = vperm.xlu0 %1698, %v1621
        %v1700 = vpop.permute.xlu0 %1699
        %v1718 = vunpack.c.l.b16 %v1590
        %v1719 = vunpack.c.l.b16 %v1591
        %v1720 = vunpack.c.l.b16 %v1592
        %v1721 = vunpack.c.l.b16 %v1593
        %v1722 = vunpack.c.l.b16 %v1594
        %v1723 = vunpack.c.l.b16 %v1595
        %v1724 = vunpack.c.l.b16 %v1596
        %v1725 = vunpack.c.l.b16 %v1597
        %v1726 = vunpack.c.l.b16 %v1598
        %v1727 = vunpack.c.l.b16 %v1599
        %v1728 = vunpack.c.l.b16 %v1600
        %v1729 = vunpack.c.l.b16 %v1601
        %v1730 = vunpack.c.l.b16 %v1602
        %v1731 = vunpack.c.l.b16 %v1603
        %v1732 = vunpack.c.l.b16 %v1604
        %v1733 = vunpack.c.l.b16 %v1605
        %v1734 = vpack.c.b16 %v1719, %v1718
        %v1735 = vpack.c.b16 %v1721, %v1720
        %v1736 = vpack.c.b16 %v1723, %v1722
        %v1737 = vpack.c.b16 %v1725, %v1724
        %v1738 = vpack.c.b16 %v1727, %v1726
        %v1739 = vpack.c.b16 %v1729, %v1728
        %v1740 = vpack.c.b16 %v1731, %v1730
        %v1741 = vpack.c.b16 %v1733, %v1732
        %1750 = vmatprep.subr.bf16.mxu0 %v1589
        %1751 = vmatpush1.bf16.msra.mxu0 %v1588
        %1752 = vmatprep.subr.bf16.mxu0 %v1587
        %1753 = vmatpush1.bf16.msra.mxu0 %v1586
        %1754 = vmatprep.subr.bf16.mxu0 %v1585
        %1755 = vmatpush1.bf16.msra.mxu0 %v1584
        %1756 = vmatprep.subr.bf16.mxu0 %v1583
        %1757 = vmatpush1.bf16.msra.mxu0 %v1582
        %1758 = vmatprep.subr.bf16.mxu0 %v1581
        %1759 = vmatpush1.bf16.msra.mxu0 %v1580
        %1760 = vmatprep.subr.bf16.mxu0 %v1579
        %1761 = vmatpush1.bf16.msra.mxu0 %v1578
        %1762 = vmatprep.subr.bf16.mxu0 %v1577
        %1763 = vmatpush1.bf16.msra.mxu0 %v1576
        %1764 = vmatprep.subr.bf16.mxu0 %v1575
        %1765 = vmatpush1.bf16.msra.mxu0 %v1574
        %1766 = vmatprep.subr.bf16.mxu0 0
        %1767 = vmatpush2.bf16.msra.mxu0 0
        %1768 = vmatprep.subr.bf16.mxu0 0
        %1769 = vmatpush2.bf16.msra.mxu0 0
        %1770 = vmatprep.subr.bf16.mxu0 0
        %1771 = vmatpush2.bf16.msra.mxu0 0
        %1772 = vmatprep.subr.bf16.mxu0 0
        %1773 = vmatpush2.bf16.msra.mxu0 0
        %1774 = vmatprep.subr.bf16.mxu0 0
        %1775 = vmatpush2.bf16.msra.mxu0 0
        %1776 = vmatprep.subr.bf16.mxu0 0
        %1777 = vmatpush2.bf16.msra.mxu0 0
        %1778 = vmatprep.subr.bf16.mxu0 0
        %1779 = vmatpush2.bf16.msra.mxu0 0
        %1780 = vmatprep.subr.bf16.mxu0 0
        %1781 = vmatpush2.bf16.msra.mxu0 0
        %1782 = vmatprep.mubr.bf16.mxu0 0
        %1783 = vmatmul.mubr.bf16.gmra.mxu0 %v1734
        %v1784 = vpop.f32.mrf.mxu0
        %v1785 = vadd.f32 %v1625, %v1784
        %v1786 = vpop.f32.mrf.mxu0
        %v1787 = vadd.f32 %v1625, %v1786
        %v1788 = vpop.f32.mrf.mxu0
        %v1789 = vadd.f32 %v1630, %v1788
        %v1790 = vpop.f32.mrf.mxu0
        %v1791 = vadd.f32 %v1630, %v1790
        %1792 = vmatprep.mubr.bf16.mxu0 0
        %1793 = vmatmul.mubr.bf16.gmra.mxu0 %v1735
        %v1794 = vpop.f32.mrf.mxu0
        %v1795 = vadd.f32 %v1635, %v1794
        %v1796 = vpop.f32.mrf.mxu0
        %v1797 = vadd.f32 %v1635, %v1796
        %v1798 = vpop.f32.mrf.mxu0
        %v1799 = vadd.f32 %v1640, %v1798
        %v1800 = vpop.f32.mrf.mxu0
        %v1801 = vadd.f32 %v1640, %v1800
        %1802 = vmatprep.mubr.bf16.mxu0 0
        %1803 = vmatmul.mubr.bf16.gmra.mxu0 %v1736
        %v1804 = vpop.f32.mrf.mxu0
        %v1805 = vadd.f32 %v1645, %v1804
        %v1806 = vpop.f32.mrf.mxu0
        %v1807 = vadd.f32 %v1645, %v1806
        %v1808 = vpop.f32.mrf.mxu0
        %v1809 = vadd.f32 %v1650, %v1808
        %v1810 = vpop.f32.mrf.mxu0
        %v1811 = vadd.f32 %v1650, %v1810
        %1812 = vmatprep.mubr.bf16.mxu0 0
        %1813 = vmatmul.mubr.bf16.gmra.mxu0 %v1737
        %v1814 = vpop.f32.mrf.mxu0
        %v1815 = vadd.f32 %v1655, %v1814
        %v1816 = vpop.f32.mrf.mxu0
        %v1817 = vadd.f32 %v1655, %v1816
        %v1818 = vpop.f32.mrf.mxu0
        %v1819 = vadd.f32 %v1660, %v1818
        %v1820 = vpop.f32.mrf.mxu0
        %v1821 = vadd.f32 %v1660, %v1820
        %1822 = vmatprep.mubr.bf16.mxu0 0
        %1823 = vmatmul.mubr.bf16.gmra.mxu0 %v1738
        %v1824 = vpop.f32.mrf.mxu0
        %v1825 = vadd.f32 %v1665, %v1824
        %v1826 = vpop.f32.mrf.mxu0
        %v1827 = vadd.f32 %v1665, %v1826
        %v1828 = vpop.f32.mrf.mxu0
        %v1829 = vadd.f32 %v1670, %v1828
        %v1830 = vpop.f32.mrf.mxu0
        %v1831 = vadd.f32 %v1670, %v1830
        %1832 = vmatprep.mubr.bf16.mxu0 0
        %1833 = vmatmul.mubr.bf16.gmra.mxu0 %v1739
        %v1834 = vpop.f32.mrf.mxu0
        %v1835 = vadd.f32 %v1675, %v1834
        %v1836 = vpop.f32.mrf.mxu0
        %v1837 = vadd.f32 %v1675, %v1836
        %v1838 = vpop.f32.mrf.mxu0
        %v1839 = vadd.f32 %v1680, %v1838
        %v1840 = vpop.f32.mrf.mxu0
        %v1841 = vadd.f32 %v1680, %v1840
        %1842 = vmatprep.mubr.bf16.mxu0 0
        %1843 = vmatmul.mubr.bf16.gmra.mxu0 %v1740
        %v1844 = vpop.f32.mrf.mxu0
        %v1845 = vadd.f32 %v1685, %v1844
        %v1846 = vpop.f32.mrf.mxu0
        %v1847 = vadd.f32 %v1685, %v1846
        %v1848 = vpop.f32.mrf.mxu0
        %v1849 = vadd.f32 %v1690, %v1848
        %v1850 = vpop.f32.mrf.mxu0
        %v1851 = vadd.f32 %v1690, %v1850
        %1852 = vmatprep.mubr.bf16.mxu0 0
        %1853 = vmatmul.mubr.bf16.gmra.mxu0 %v1741
        %v1854 = vpop.f32.mrf.mxu0
        %v1855 = vadd.f32 %v1695, %v1854
        %v1856 = vpop.f32.mrf.mxu0
        %v1857 = vadd.f32 %v1695, %v1856
        %v1858 = vpop.f32.mrf.mxu0
        %v1859 = vadd.f32 %v1700, %v1858
        %v1860 = vpop.f32.mrf.mxu0
        %v1861 = vadd.f32 %v1700, %v1860
        %1862 = vdwg.mxu0
        %v1863 = vmax.f32 %v1785, 0.0
        %v1864 = vmax.f32 %v1787, 0.0
        %v1865 = vmax.f32 %v1789, 0.0
        %v1866 = vmax.f32 %v1791, 0.0
        %v1867 = vmax.f32 %v1795, 0.0
        %v1868 = vmax.f32 %v1797, 0.0
        %v1869 = vmax.f32 %v1799, 0.0
        %v1870 = vmax.f32 %v1801, 0.0
        %v1871 = vmax.f32 %v1805, 0.0
        %v1872 = vmax.f32 %v1807, 0.0
        %v1873 = vmax.f32 %v1809, 0.0
        %v1874 = vmax.f32 %v1811, 0.0
        %v1875 = vmax.f32 %v1815, 0.0
        %v1876 = vmax.f32 %v1817, 0.0
        %v1877 = vmax.f32 %v1819, 0.0
        %v1878 = vmax.f32 %v1821, 0.0
        %v1879 = vmax.f32 %v1825, 0.0
        %v1880 = vmax.f32 %v1827, 0.0
        %v1881 = vmax.f32 %v1829, 0.0
        %v1882 = vmax.f32 %v1831, 0.0
        %v1883 = vmax.f32 %v1835, 0.0
        %v1884 = vmax.f32 %v1837, 0.0
        %v1885 = vmax.f32 %v1839, 0.0
        %v1886 = vmax.f32 %v1841, 0.0
        %v1887 = vmax.f32 %v1845, 0.0
        %v1888 = vmax.f32 %v1847, 0.0
        %v1889 = vmax.f32 %v1849, 0.0
        %v1890 = vmax.f32 %v1851, 0.0
        %v1891 = vmax.f32 %v1855, 0.0
        %v1892 = vmax.f32 %v1857, 0.0
        %v1893 = vmax.f32 %v1859, 0.0
        %v1894 = vmax.f32 %v1861, 0.0
        %v1895 = vpack.c.bf16 %v1865, %v1863
        %v1896 = vpack.c.bf16 %v1866, %v1864
        %v1897 = vpack.c.bf16 %v1869, %v1867
        %v1898 = vpack.c.bf16 %v1870, %v1868
        %v1899 = vpack.c.bf16 %v1873, %v1871
        %v1900 = vpack.c.bf16 %v1874, %v1872
        %v1901 = vpack.c.bf16 %v1877, %v1875
        %v1902 = vpack.c.bf16 %v1878, %v1876
        %v1903 = vpack.c.bf16 %v1881, %v1879
        %v1904 = vpack.c.bf16 %v1882, %v1880
        %v1905 = vpack.c.bf16 %v1885, %v1883
        %v1906 = vpack.c.bf16 %v1886, %v1884
        %v1907 = vpack.c.bf16 %v1889, %v1887
        %v1908 = vpack.c.bf16 %v1890, %v1888
        %v1909 = vpack.c.bf16 %v1893, %v1891
        %v1910 = vpack.c.bf16 %v1894, %v1892
        %v1911 = vld [vmem:[%s7] sm:$0xf]
        %v1912 = vld [vmem:[%s7 + $0x4] sm:$0xf]
        %v1913 = vld [vmem:[%s7 + $0x8] sm:$0xf]
        %v1914 = vld [vmem:[%s7 + $0xc] sm:$0xf]
        %v1915 = vld [vmem:[%s7 + $0x10] sm:$0xf]
        %v1916 = vld [vmem:[%s7 + $0x14] sm:$0xf]
        %v1917 = vld [vmem:[%s7 + $0x18] sm:$0xf]
        %v1918 = vld [vmem:[%s7 + $0x1c] sm:$0xf]
        %v1919 = vld [vmem:[%s7 + $0x20] sm:$0xf]
        %v1920 = vld [vmem:[%s7 + $0x24] sm:$0xf]
        %v1921 = vld [vmem:[%s7 + $0x28] sm:$0xf]
        %v1922 = vld [vmem:[%s7 + $0x2c] sm:$0xf]
        %v1923 = vld [vmem:[%s7 + $0x30] sm:$0xf]
        %v1924 = vld [vmem:[%s7 + $0x34] sm:$0xf]
        %v1925 = vld [vmem:[%s7 + $0x38] sm:$0xf]
        %v1926 = vld [vmem:[%s7 + $0x3c] sm:$0xf]
        %v1927 = vld [vmem:[%s8] sm:$0xff]
        %v1928 = vld [vmem:[%s8 + $0x8] sm:$0xff]
        %v1929 = vld [vmem:[%s8 + $0x10] sm:$0xff]
        %v1930 = vld [vmem:[%s8 + $0x18] sm:$0xff]
        %v1931 = vld [vmem:[%s8 + $0x20] sm:$0xff]
        %v1932 = vld [vmem:[%s8 + $0x28] sm:$0xff]
        %v1933 = vld [vmem:[%s8 + $0x30] sm:$0xff]
        %v1934 = vld [vmem:[%s8 + $0x38] sm:$0xff]
        %v1935 = vld [vmem:[%s8 + $0x40] sm:$0xff]
        %v1936 = vld [vmem:[%s8 + $0x48] sm:$0xff]
        %v1937 = vld [vmem:[%s8 + $0x50] sm:$0xff]
        %v1938 = vld [vmem:[%s8 + $0x58] sm:$0xff]
        %v1939 = vld [vmem:[%s8 + $0x60] sm:$0xff]
        %v1940 = vld [vmem:[%s8 + $0x68] sm:$0xff]
        %v1941 = vld [vmem:[%s8 + $0x70] sm:$0xff]
        %v1942 = vld [vmem:[%s8 + $0x78] sm:$0xff]
        %1944 = vset.pattern.permute.xlu0 0
        %1945 = vperm.xlu0 %1944, %v1927
        %v1946 = vpop.permute.xlu0 %1945
        %1949 = vset.pattern.permute.xlu0 0
        %1950 = vperm.xlu0 %1949, %v1928
        %v1951 = vpop.permute.xlu0 %1950
        %1954 = vset.pattern.permute.xlu0 0
        %1955 = vperm.xlu0 %1954, %v1929
        %v1956 = vpop.permute.xlu0 %1955
        %1959 = vset.pattern.permute.xlu0 0
        %1960 = vperm.xlu0 %1959, %v1930
        %v1961 = vpop.permute.xlu0 %1960
        %1964 = vset.pattern.permute.xlu0 0
        %1965 = vperm.xlu0 %1964, %v1931
        %v1966 = vpop.permute.xlu0 %1965
        %1969 = vset.pattern.permute.xlu0 0
        %1970 = vperm.xlu0 %1969, %v1932
        %v1971 = vpop.permute.xlu0 %1970
        %1974 = vset.pattern.permute.xlu0 0
        %1975 = vperm.xlu0 %1974, %v1933
        %v1976 = vpop.permute.xlu0 %1975
        %1979 = vset.pattern.permute.xlu0 0
        %1980 = vperm.xlu0 %1979, %v1934
        %v1981 = vpop.permute.xlu0 %1980
        %1984 = vset.pattern.permute.xlu0 0
        %1985 = vperm.xlu0 %1984, %v1935
        %v1986 = vpop.permute.xlu0 %1985
        %1989 = vset.pattern.permute.xlu0 0
        %1990 = vperm.xlu0 %1989, %v1936
        %v1991 = vpop.permute.xlu0 %1990
        %1994 = vset.pattern.permute.xlu0 0
        %1995 = vperm.xlu0 %1994, %v1937
        %v1996 = vpop.permute.xlu0 %1995
        %1999 = vset.pattern.permute.xlu0 0
        %2000 = vperm.xlu0 %1999, %v1938
        %v2001 = vpop.permute.xlu0 %2000
        %2004 = vset.pattern.permute.xlu0 0
        %2005 = vperm.xlu0 %2004, %v1939
        %v2006 = vpop.permute.xlu0 %2005
        %2009 = vset.pattern.permute.xlu0 0
        %2010 = vperm.xlu0 %2009, %v1940
        %v2011 = vpop.permute.xlu0 %2010
        %2014 = vset.pattern.permute.xlu0 0
        %2015 = vperm.xlu0 %2014, %v1941
        %v2016 = vpop.permute.xlu0 %2015
        %2019 = vset.pattern.permute.xlu0 0
        %2020 = vperm.xlu0 %2019, %v1942
        %v2021 = vpop.permute.xlu0 %2020
        %v2039 = vunpack.c.l.b16 %v1911
        %v2040 = vunpack.c.l.b16 %v1912
        %v2041 = vunpack.c.l.b16 %v1913
        %v2042 = vunpack.c.l.b16 %v1914
        %v2043 = vunpack.c.l.b16 %v1915
        %v2044 = vunpack.c.l.b16 %v1916
        %v2045 = vunpack.c.l.b16 %v1917
        %v2046 = vunpack.c.l.b16 %v1918
        %v2047 = vunpack.c.l.b16 %v1919
        %v2048 = vunpack.c.l.b16 %v1920
        %v2049 = vunpack.c.l.b16 %v1921
        %v2050 = vunpack.c.l.b16 %v1922
        %v2051 = vunpack.c.l.b16 %v1923
        %v2052 = vunpack.c.l.b16 %v1924
        %v2053 = vunpack.c.l.b16 %v1925
        %v2054 = vunpack.c.l.b16 %v1926
        %v2055 = vpack.c.b16 %v2040, %v2039
        %v2056 = vpack.c.b16 %v2042, %v2041
        %v2057 = vpack.c.b16 %v2044, %v2043
        %v2058 = vpack.c.b16 %v2046, %v2045
        %v2059 = vpack.c.b16 %v2048, %v2047
        %v2060 = vpack.c.b16 %v2050, %v2049
        %v2061 = vpack.c.b16 %v2052, %v2051
        %v2062 = vpack.c.b16 %v2054, %v2053
        %2071 = vmatprep.subr.bf16.mxu0 %v1910
        %2072 = vmatpush1.bf16.msra.mxu0 %v1909
        %2073 = vmatprep.subr.bf16.mxu0 %v1908
        %2074 = vmatpush1.bf16.msra.mxu0 %v1907
        %2075 = vmatprep.subr.bf16.mxu0 %v1906
        %2076 = vmatpush1.bf16.msra.mxu0 %v1905
        %2077 = vmatprep.subr.bf16.mxu0 %v1904
        %2078 = vmatpush1.bf16.msra.mxu0 %v1903
        %2079 = vmatprep.subr.bf16.mxu0 %v1902
        %2080 = vmatpush1.bf16.msra.mxu0 %v1901
        %2081 = vmatprep.subr.bf16.mxu0 %v1900
        %2082 = vmatpush1.bf16.msra.mxu0 %v1899
        %2083 = vmatprep.subr.bf16.mxu0 %v1898
        %2084 = vmatpush1.bf16.msra.mxu0 %v1897
        %2085 = vmatprep.subr.bf16.mxu0 %v1896
        %2086 = vmatpush1.bf16.msra.mxu0 %v1895
        %2087 = vmatprep.subr.bf16.mxu0 0
        %2088 = vmatpush2.bf16.msra.mxu0 0
        %2089 = vmatprep.subr.bf16.mxu0 0
        %2090 = vmatpush2.bf16.msra.mxu0 0
        %2091 = vmatprep.subr.bf16.mxu0 0
        %2092 = vmatpush2.bf16.msra.mxu0 0
        %2093 = vmatprep.subr.bf16.mxu0 0
        %2094 = vmatpush2.bf16.msra.mxu0 0
        %2095 = vmatprep.subr.bf16.mxu0 0
        %2096 = vmatpush2.bf16.msra.mxu0 0
        %2097 = vmatprep.subr.bf16.mxu0 0
        %2098 = vmatpush2.bf16.msra.mxu0 0
        %2099 = vmatprep.subr.bf16.mxu0 0
        %2100 = vmatpush2.bf16.msra.mxu0 0
        %2101 = vmatprep.subr.bf16.mxu0 0
        %2102 = vmatpush2.bf16.msra.mxu0 0
        %2103 = vmatprep.mubr.bf16.mxu0 0
        %2104 = vmatmul.mubr.bf16.gmra.mxu0 %v2055
        %v2105 = vpop.f32.mrf.mxu0
        %v2106 = vadd.f32 %v1946, %v2105
        %v2107 = vpop.f32.mrf.mxu0
        %v2108 = vadd.f32 %v1946, %v2107
        %v2109 = vpop.f32.mrf.mxu0
        %v2110 = vadd.f32 %v1951, %v2109
        %v2111 = vpop.f32.mrf.mxu0
        %v2112 = vadd.f32 %v1951, %v2111
        %2113 = vmatprep.mubr.bf16.mxu0 0
        %2114 = vmatmul.mubr.bf16.gmra.mxu0 %v2056
        %v2115 = vpop.f32.mrf.mxu0
        %v2116 = vadd.f32 %v1956, %v2115
        %v2117 = vpop.f32.mrf.mxu0
        %v2118 = vadd.f32 %v1956, %v2117
        %v2119 = vpop.f32.mrf.mxu0
        %v2120 = vadd.f32 %v1961, %v2119
        %v2121 = vpop.f32.mrf.mxu0
        %v2122 = vadd.f32 %v1961, %v2121
        %2123 = vmatprep.mubr.bf16.mxu0 0
        %2124 = vmatmul.mubr.bf16.gmra.mxu0 %v2057
        %v2125 = vpop.f32.mrf.mxu0
        %v2126 = vadd.f32 %v1966, %v2125
        %v2127 = vpop.f32.mrf.mxu0
        %v2128 = vadd.f32 %v1966, %v2127
        %v2129 = vpop.f32.mrf.mxu0
        %v2130 = vadd.f32 %v1971, %v2129
        %v2131 = vpop.f32.mrf.mxu0
        %v2132 = vadd.f32 %v1971, %v2131
        %2133 = vmatprep.mubr.bf16.mxu0 0
        %2134 = vmatmul.mubr.bf16.gmra.mxu0 %v2058
        %v2135 = vpop.f32.mrf.mxu0
        %v2136 = vadd.f32 %v1976, %v2135
        %v2137 = vpop.f32.mrf.mxu0
        %v2138 = vadd.f32 %v1976, %v2137
        %v2139 = vpop.f32.mrf.mxu0
        %v2140 = vadd.f32 %v1981, %v2139
        %v2141 = vpop.f32.mrf.mxu0
        %v2142 = vadd.f32 %v1981, %v2141
        %2143 = vmatprep.mubr.bf16.mxu0 0
        %2144 = vmatmul.mubr.bf16.gmra.mxu0 %v2059
        %v2145 = vpop.f32.mrf.mxu0
        %v2146 = vadd.f32 %v1986, %v2145
        %v2147 = vpop.f32.mrf.mxu0
        %v2148 = vadd.f32 %v1986, %v2147
        %v2149 = vpop.f32.mrf.mxu0
        %v2150 = vadd.f32 %v1991, %v2149
        %v2151 = vpop.f32.mrf.mxu0
        %v2152 = vadd.f32 %v1991, %v2151
        %2153 = vmatprep.mubr.bf16.mxu0 0
        %2154 = vmatmul.mubr.bf16.gmra.mxu0 %v2060
        %v2155 = vpop.f32.mrf.mxu0
        %v2156 = vadd.f32 %v1996, %v2155
        %v2157 = vpop.f32.mrf.mxu0
        %v2158 = vadd.f32 %v1996, %v2157
        %v2159 = vpop.f32.mrf.mxu0
        %v2160 = vadd.f32 %v2001, %v2159
        %v2161 = vpop.f32.mrf.mxu0
        %v2162 = vadd.f32 %v2001, %v2161
        %2163 = vmatprep.mubr.bf16.mxu0 0
        %2164 = vmatmul.mubr.bf16.gmra.mxu0 %v2061
        %v2165 = vpop.f32.mrf.mxu0
        %v2166 = vadd.f32 %v2006, %v2165
        %v2167 = vpop.f32.mrf.mxu0
        %v2168 = vadd.f32 %v2006, %v2167
        %v2169 = vpop.f32.mrf.mxu0
        %v2170 = vadd.f32 %v2011, %v2169
        %v2171 = vpop.f32.mrf.mxu0
        %v2172 = vadd.f32 %v2011, %v2171
        %2173 = vmatprep.mubr.bf16.mxu0 0
        %2174 = vmatmul.mubr.bf16.gmra.mxu0 %v2062
        %v2175 = vpop.f32.mrf.mxu0
        %v2176 = vadd.f32 %v2016, %v2175
        %v2177 = vpop.f32.mrf.mxu0
        %v2178 = vadd.f32 %v2016, %v2177
        %v2179 = vpop.f32.mrf.mxu0
        %v2180 = vadd.f32 %v2021, %v2179
        %v2181 = vpop.f32.mrf.mxu0
        %v2182 = vadd.f32 %v2021, %v2181
        %2183 = vdwg.mxu0
        %v2184 = vpack.c.bf16 %v2110, %v2106
        %v2185 = vpack.c.bf16 %v2112, %v2108
        %v2186 = vpack.c.bf16 %v2120, %v2116
        %v2187 = vpack.c.bf16 %v2122, %v2118
        %v2188 = vpack.c.bf16 %v2130, %v2126
        %v2189 = vpack.c.bf16 %v2132, %v2128
        %v2190 = vpack.c.bf16 %v2140, %v2136
        %v2191 = vpack.c.bf16 %v2142, %v2138
        %v2192 = vpack.c.bf16 %v2150, %v2146
        %v2193 = vpack.c.bf16 %v2152, %v2148
        %v2194 = vpack.c.bf16 %v2160, %v2156
        %v2195 = vpack.c.bf16 %v2162, %v2158
        %v2196 = vpack.c.bf16 %v2170, %v2166
        %v2197 = vpack.c.bf16 %v2172, %v2168
        %v2198 = vpack.c.bf16 %v2180, %v2176
        %v2199 = vpack.c.bf16 %v2182, %v2178
        %v2216 = vunpack.c.l.b16 %v2184
        %v2217 = vunpack.c.l.b16 %v2185
        %v2218 = vunpack.c.h.b16 %v2184
        %v2219 = vunpack.c.h.b16 %v2185
        %v2220 = vunpack.c.l.b16 %v2186
        %v2221 = vunpack.c.l.b16 %v2187
        %v2222 = vunpack.c.h.b16 %v2186
        %v2223 = vunpack.c.h.b16 %v2187
        %v2224 = vunpack.c.l.b16 %v2188
        %v2225 = vunpack.c.l.b16 %v2189
        %v2226 = vunpack.c.h.b16 %v2188
        %v2227 = vunpack.c.h.b16 %v2189
        %v2228 = vunpack.c.l.b16 %v2190
        %v2229 = vunpack.c.l.b16 %v2191
        %v2230 = vunpack.c.h.b16 %v2190
        %v2231 = vunpack.c.h.b16 %v2191
        %v2232 = vunpack.c.l.b16 %v2192
        %v2233 = vunpack.c.l.b16 %v2193
        %v2234 = vunpack.c.h.b16 %v2192
        %v2235 = vunpack.c.h.b16 %v2193
        %v2236 = vunpack.c.l.b16 %v2194
        %v2237 = vunpack.c.l.b16 %v2195
        %v2238 = vunpack.c.h.b16 %v2194
        %v2239 = vunpack.c.h.b16 %v2195
        %v2240 = vunpack.c.l.b16 %v2196
        %v2241 = vunpack.c.l.b16 %v2197
        %v2242 = vunpack.c.h.b16 %v2196
        %v2243 = vunpack.c.h.b16 %v2197
        %v2244 = vunpack.c.l.b16 %v2198
        %v2245 = vunpack.c.l.b16 %v2199
        %v2246 = vunpack.c.h.b16 %v2198
        %v2247 = vunpack.c.h.b16 %v2199
        %v2248 = vpack.c.b16 %v2217, %v2216
        %v2249 = vpack.c.b16 %v2219, %v2218
        %v2250 = vpack.c.b16 %v2221, %v2220
        %v2251 = vpack.c.b16 %v2223, %v2222
        %v2252 = vpack.c.b16 %v2225, %v2224
        %v2253 = vpack.c.b16 %v2227, %v2226
        %v2254 = vpack.c.b16 %v2229, %v2228
        %v2255 = vpack.c.b16 %v2231, %v2230
        %v2256 = vpack.c.b16 %v2233, %v2232
        %v2257 = vpack.c.b16 %v2235, %v2234
        %v2258 = vpack.c.b16 %v2237, %v2236
        %v2259 = vpack.c.b16 %v2239, %v2238
        %v2260 = vpack.c.b16 %v2241, %v2240
        %v2261 = vpack.c.b16 %v2243, %v2242
        %v2262 = vpack.c.b16 %v2245, %v2244
        %v2263 = vpack.c.b16 %v2247, %v2246
        %2280 = vst [vmem:[%s368] sm:$0xff] %v2248
        %2281 = vst [vmem:[%s368 + $0x8] sm:$0xff] %v2249
        %2282 = vst [vmem:[%s368 + $0x10] sm:$0xff] %v2250
        %2283 = vst [vmem:[%s368 + $0x18] sm:$0xff] %v2251
        %2284 = vst [vmem:[%s368 + $0x20] sm:$0xff] %v2252
        %2285 = vst [vmem:[%s368 + $0x28] sm:$0xff] %v2253
        %2286 = vst [vmem:[%s368 + $0x30] sm:$0xff] %v2254
        %2287 = vst [vmem:[%s368 + $0x38] sm:$0xff] %v2255
        %2288 = vst [vmem:[%s368 + $0x40] sm:$0xff] %v2256
        %2289 = vst [vmem:[%s368 + $0x48] sm:$0xff] %v2257
        %2290 = vst [vmem:[%s368 + $0x50] sm:$0xff] %v2258
        %2291 = vst [vmem:[%s368 + $0x58] sm:$0xff] %v2259
        %2292 = vst [vmem:[%s368 + $0x60] sm:$0xff] %v2260
        %2293 = vst [vmem:[%s368 + $0x68] sm:$0xff] %v2261
        %2294 = vst [vmem:[%s368 + $0x70] sm:$0xff] %v2262
        %2295 = vst [vmem:[%s368 + $0x78] sm:$0xff] %v2263
        %s2296 = sand.u32 %s244, 1
        %s2297 = scalar_lea.sflag [#allocation4], %s2296
        %s2298 = sand.u32 %s244, 1
        %s2299 = smul.addr %s2298, 128
        %s2300 = scalar_lea.vmem [#allocation5], %s2299
        // Predicated region
        $region61: #{tpu_custom_call.1} parent=55 // pred_check
          %p2301 = pneg %p254
        $region62: #{tpu_custom_call.1} parent=55 // pred_check_branch
          %2303 = sbr.rel (%p2301) target = $region64
        $region63: #{tpu_custom_call.1} parent=55 // pred_region
          %s2304 = smul.u32 2, %s31
          %s2306 = ssub.s32 2048, 2048
          %2307 = vsyncadd %s2297, %s2306
          %s2308 = smul.addr %s30, 64
          %s2309 = sadd.s32 %s2304, %s2308
          %s2310 = smul.addr %s2309, 64
          %s2311 = scalar_lea.hbm %s9, %s2310
          %s2312 = sshll.u32 %s2300, 4
          %s2313 = int_to_ptr.vmem [resolvable:$true] %s2312
          %2318 = dma.vmem_to_hbm [thread:$0]  %s2313, 2048, %s2311, %s2297, 128, 256, 8
        $region64: #{tpu_custom_call.1} parent=55 // pred_fallthru
          _
      $region56: #{tpu_custom_call.1} parent=5 // pred_fallthru
        _
      %p2319 = scmp.le.s32.totalorder 2, %s21
      // Predicated region
      $region65: #{tpu_custom_call.1} parent=5 // pred_check
        %p2320 = pneg %p2319
      $region66: #{tpu_custom_call.1} parent=5 // pred_check_branch
        %2322 = sbr.rel (%p2320) target = $region68
      $region67: #{tpu_custom_call.1} parent=5 // pred_region
        %s2323 = ssub.s32 %s21, 2
        // Predicated region
        $region69: #{tpu_custom_call.1} parent=67 // pred_check
          %p2324 = pneg %p260
        $region70: #{tpu_custom_call.1} parent=67 // pred_check_branch
          %2326 = sbr.rel (%p2324) target = $region72
        $region71: #{tpu_custom_call.1} parent=67 // pred_region
          %s2327 = sand.u32 %s245, 1
          %s2328 = scalar_lea.sflag [#allocation4], %s2327
          %s2329 = sand.u32 %s245, 1
          %s2330 = smul.addr %s2329, 128
          %s2331 = scalar_lea.vmem [#allocation5], %s2330
          %2332 = dma.done %s2328, 2048
        $region72: #{tpu_custom_call.1} parent=67 // pred_fallthru
          _
      $region68: #{tpu_custom_call.1} parent=5 // pred_fallthru
        _
    $region6: #{tpu_custom_call.1} parent=1 // loop_footer
      %s25 = sadd.s32 1, %s21
    $region7: #{tpu_custom_call.1} parent=1 // loop_footer_branch
      %20 = sbr.rel target = $region3
    $region8: #{tpu_custom_call.1} parent=1 // loop_exit
      _
    %2333 = vsyncpa [#allocation3], 1
    %s2334 = scalar_lea.sflag [#allocation3], 1
    %2335 = vsyncpa %s2334, 1
    %2336 = vsyncpa [#allocation4], 1
    %s2337 = scalar_lea.sflag [#allocation4], 1
    %2338 = vsyncpa %s2337, 1

</llo_original>
